<compile_context>
chip_gen: v7x
topology: tpu7x:2x2x1
jax: 0.10.0
libtpu: 0.0.40
codegen_flags: <defaults>
</compile_context>

<pallas_src>
import numpy as np
import jax
import jax.numpy as jnp
from jax import lax
from jax.experimental import pallas as pl
from jax.experimental.pallas import tpu as pltpu


# ---------------------------------------------------------------------------
# Kernel
# ---------------------------------------------------------------------------
def _spblock_kernel(x_ref, w1_ref, b1_ref, w2_ref, b2_ref, w3_ref, b3_ref, o_ref):
    x = x_ref[0]                                   # (C, H, W) f32
    C, H, W = x.shape
    compute_dtype = w1_ref.dtype                   # bf16 (default) or f32

    # ---- strip pooling: direct reductions (no pooling matmuls) -------------
    # Sum in f32, scale in f32 (avoids bf16 bias on the means).
    pool_w = jnp.sum(x, axis=2) * (1.0 / W)        # (C, H)  mean over width
    pool_h = jnp.sum(x, axis=1) * (1.0 / H)        # (C, W)  mean over height

    zc = jnp.zeros((C, 1), jnp.float32)

    # ---- conv1: (3,1) strip conv along H, padding 1, BN1 scale folded ------
    # Three taps stacked along the contraction dim -> one MXU matmul.
    rhs1 = jnp.concatenate(
        [jnp.concatenate([zc, pool_w[:, :H - 1]], axis=1),   # value at h-1
         pool_w,                                             # value at h
         jnp.concatenate([pool_w[:, 1:], zc], axis=1)],      # value at h+1
        axis=0).astype(compute_dtype)                        # (3C, H)
    out1 = (jnp.dot(w1_ref[...], rhs1, preferred_element_type=jnp.float32)
            + b1_ref[...])                                   # (mid, H) + (mid,1)

    # ---- conv2: (1,3) strip conv along W, padding 1, BN2 scale folded ------
    rhs2 = jnp.concatenate(
        [jnp.concatenate([zc, pool_h[:, :W - 1]], axis=1),   # value at w-1
         pool_h,                                             # value at w
         jnp.concatenate([pool_h[:, 1:], zc], axis=1)],      # value at w+1
        axis=0).astype(compute_dtype)                        # (3C, W)
    out2 = (jnp.dot(w2_ref[...], rhs2, preferred_element_type=jnp.float32)
            + b2_ref[...])                                   # (mid, W) + (mid,1)

    # ---- recombine strips: VPU broadcast add + ReLU (no expansion matmuls) --
    y = jnp.maximum(out1[:, :, None] + out2[:, None, :], 0.0)       # (mid, H, W)
    mid = y.shape[0]
    y_flat = y.reshape(mid, H * W).astype(compute_dtype)            # (mid, HW)

    # ---- 1x1 conv + bias (broadcast add), sigmoid gate ---------------------
    z = (jnp.dot(w3_ref[...], y_flat, preferred_element_type=jnp.float32)
         + b3_ref[...])                                              # (cout, HW)
    gate = jax.nn.sigmoid(z)

    # ---- gate the input; lane-dense (C, HW) store --------------------------
    o_ref[0] = (x.reshape(C, H * W) * gate).astype(o_ref.dtype)


# ---------------------------------------------------------------------------
# Wrapper
# ---------------------------------------------------------------------------
def spblock_pallas(x, w1s, b1, w2s, b2, w3, b3, *, compute_dtype=jnp.bfloat16):
    """x: (N, C, H, W) f32.
    w1s/w2s: (mid, 3C) strip-conv taps (BN scale folded), b1/b2: (mid,) folded BN bias.
    w3: (cout, mid) 1x1 conv weight, b3: (cout,) bias."""
    N, C, H, W = x.shape
    HW = H * W
    mid = w1s.shape[0]
    cout = w3.shape[0]
    assert w1s.shape == (mid, 3 * C) and w2s.shape == (mid, 3 * C)
    assert w3.shape == (cout, mid)
    # SPBlock does `input * sigmoid(conv3(...))` -> gate channels must match x.
    assert cout == C, "SPBlock gating requires outplanes == inplanes"

    # MXU operands in compute_dtype (bf16 by default: ~3x MXU throughput,
    # halves weight VMEM/HBM); biases stay f32 (added to f32 accumulators).
    w1c = jnp.asarray(w1s, compute_dtype)
    w2c = jnp.asarray(w2s, compute_dtype)
    w3c = jnp.asarray(w3, compute_dtype)
    b1c = jnp.asarray(b1, jnp.float32).reshape(mid, 1)
    b2c = jnp.asarray(b2, jnp.float32).reshape(mid, 1)
    b3c = jnp.asarray(b3, jnp.float32).reshape(cout, 1)

    # ---- VMEM budget: derived from block sizes, clamped to the device cap ----
    x_item = jnp.dtype(x.dtype).itemsize
    w_item = jnp.dtype(compute_dtype).itemsize
    block_bytes = C * HW * x_item                          # one x / out block
    weight_bytes = (2 * mid * 3 * C + cout * mid) * w_item + (2 * mid + cout) * 4
    interm_bytes = (mid + 2 * cout) * HW * 4 + mid * HW * w_item
    need = 2 * 2 * block_bytes + 2 * weight_bytes + interm_bytes + (4 << 20)
    try:
        vmem_cap = int(getattr(pltpu.get_tpu_info(), "vmem_capacity_bytes",
                               64 << 20))
    except Exception:
        vmem_cap = 64 << 20                                # v7x floor
    vmem_limit = int(min(max(need, 16 << 20), int(0.9 * vmem_cap)))

    args = (x, w1c, b1c, w2c, b2c, w3c, b3c)

    def build(single_buffer_consts):
        def const_spec(shape):
            idx = lambda n: (0,) * len(shape)
            if single_buffer_consts:
                # Constant index_map across the grid -> single-buffer (no
                # wasted double-buffer VMEM, Pallas skips the re-DMA anyway).
                return pl.BlockSpec(shape, idx, pipeline_mode=pl.Buffered(1))
            return pl.BlockSpec(shape, idx)

        return pl.pallas_call(
            _spblock_kernel,
            out_shape=jax.ShapeDtypeStruct((N, C, HW), x.dtype),
            grid=(N,),
            in_specs=[
                pl.BlockSpec((1, C, H, W), lambda n: (n, 0, 0, 0)),  # x
                const_spec((mid, 3 * C)),                            # conv1 taps (BN folded)
                const_spec((mid, 1)),                                # BN1 bias
                const_spec((mid, 3 * C)),                            # conv2 taps (BN folded)
                const_spec((mid, 1)),                                # BN2 bias
                const_spec((cout, mid)),                             # conv3 weight
                const_spec((cout, 1)),                               # conv3 bias
            ],
            out_specs=pl.BlockSpec((1, C, HW), lambda n: (n, 0, 0)),  # lane-dense
            compiler_params=pltpu.CompilerParams(
                dimension_semantics=("parallel",),
                vmem_limit_bytes=vmem_limit,
            ),
        )

    try:
        out_flat = build(True)(*args)
    except Exception:
        # Fallback if pipeline_mode/Buffered(1) is rejected by this JAX version.
        out_flat = build(False)(*args)

    return out_flat.reshape(N, C, H, W)


# ---------------------------------------------------------------------------
# Parameter preparation (eval-mode BN folded into the strip convs)
# ---------------------------------------------------------------------------
def fold_bn_strip_conv(conv_taps, gamma, beta, mean, var, eps=1e-5):
    """conv_taps: (mid, C, 3) — taps ordered [-1, 0, +1] along the strip axis.
    Returns (w_stacked (mid, 3C), bias (mid,))."""
    s = gamma / jnp.sqrt(var + eps)                       # (mid,)
    bias = beta - s * mean                                # (mid,)
    w = conv_taps * s[:, None, None]                      # BN scale folded in
    w_stacked = jnp.concatenate([w[:, :, 0], w[:, :, 1], w[:, :, 2]], axis=1)
    return w_stacked.astype(jnp.float32), bias.astype(jnp.float32)


# ---------------------------------------------------------------------------
# Pure-JAX reference (mirrors the PyTorch forward, eval-mode BN).
# ---------------------------------------------------------------------------
def spblock_ref(x, conv1_w, bn1, conv2_w, bn2, conv3_w, conv3_b, eps=1e-5):
    N, C, H, W = x.shape
    dn = ("NCHW", "OIHW", "NCHW")

    def bn_apply(v, p):
        g, b, m, var = p
        s = g / jnp.sqrt(var + eps)
        return v * s[None, :, None, None] + (b - s * m)[None, :, None, None]

    p1 = jnp.mean(x, axis=3, keepdims=True)                                   # (N,C,H,1)
    x1 = lax.conv_general_dilated(p1, conv1_w, (1, 1), [(1, 1), (0, 0)],
                                  dimension_numbers=dn)
    x1 = bn_apply(x1, bn1)
    x1 = jnp.broadcast_to(x1, (N, x1.shape[1], H, W))

    p2 = jnp.mean(x, axis=2, keepdims=True)                                   # (N,C,1,W)
    x2 = lax.conv_general_dilated(p2, conv2_w, (1, 1), [(0, 0), (1, 1)],
                                  dimension_numbers=dn)
    x2 = bn_apply(x2, bn2)
    x2 = jnp.broadcast_to(x2, (N, x2.shape[1], H, W))

    y = jax.nn.relu(x1 + x2)
    z = lax.conv_general_dilated(y, conv3_w, (1, 1), "VALID", dimension_numbers=dn)
    z = jax.nn.sigmoid(z + conv3_b[None, :, None, None])
    return x * z


if __name__ == "__main__":
    # Small shapes: batch=2, inplanes=outplanes=midplanes=4, H=W=16.
    N, C, H, W = 2, 4, 16, 16
    mid = C
    eps = 1e-5

    key = jax.random.PRNGKey(0)
    k1, k2, k3, kx = jax.random.split(key, 4)

    # Deterministic parameter init (torch-style shapes).
    conv1_w = jax.random.normal(k1, (mid, C, 3, 1), jnp.float32) * 0.3
    conv2_w = jax.random.normal(k2, (mid, C, 1, 3), jnp.float32) * 0.3
    conv3_w = jax.random.normal(k3, (C, mid, 1, 1), jnp.float32) * 0.3
    conv3_b = jnp.linspace(-0.1, 0.1, C, dtype=jnp.float32)

    ar = jnp.arange(mid, dtype=jnp.float32)
    bn1 = (1.0 + 0.10 * ar, 0.02 * ar, 0.03 * ar, 1.0 + 0.05 * ar)  # gamma, beta, mean, var
    bn2 = (1.0 - 0.05 * ar, -0.01 * ar, 0.02 * ar, 1.0 + 0.10 * ar)

    x = jax.random.normal(kx, (N, C, H, W), jnp.float32)

    # Fold BN (eval mode) into strip-conv weights / biases for the kernel.
    w1s, b1 = fold_bn_strip_conv(conv1_w[:, :, :, 0], *bn1, eps=eps)   # (mid,3C),(mid,)
    w2s, b2 = fold_bn_strip_conv(conv2_w[:, :, 0, :], *bn2, eps=eps)   # (mid,3C),(mid,)
    w3 = conv3_w[:, :, 0, 0]                                           # (cout, mid)
    b3 = conv3_b                                                       # (cout,)

    ref = jax.block_until_ready(
        spblock_ref(x, conv1_w, bn1, conv2_w, bn2, conv3_w, conv3_b, eps=eps))

    # Recommended production config: bf16 MXU operands, f32 accumulation.
    out_bf16 = jax.block_until_ready(
        spblock_pallas(x, w1s, b1, w2s, b2, w3, b3, compute_dtype=jnp.bfloat16))
    np.testing.assert_allclose(np.asarray(out_bf16), np.asarray(ref),
                               rtol=1e-2, atol=1e-2)

    # f32 path for the strict correctness check.
    out_f32 = jax.block_until_ready(
        spblock_pallas(x, w1s, b1, w2s, b2, w3, b3, compute_dtype=jnp.float32))
    np.testing.assert_allclose(np.asarray(out_f32), np.asarray(ref),
                               rtol=1e-3, atol=1e-3)

    print("KERNEL_OK")
</pallas_src>

<mosaic_0001>
module attributes {stable_mosaic.version = 11 : i64} {
  func.func @_spblock_kernel(%arg0: i32, %arg1: memref<1x4x16x16xf32, #tpu.memory_space<vmem>>, %arg2: memref<4x12xbf16, #tpu.memory_space<vmem>>, %arg3: memref<4x1xf32, #tpu.memory_space<vmem>>, %arg4: memref<4x12xbf16, #tpu.memory_space<vmem>>, %arg5: memref<4x1xf32, #tpu.memory_space<vmem>>, %arg6: memref<4x4xbf16, #tpu.memory_space<vmem>>, %arg7: memref<4x1xf32, #tpu.memory_space<vmem>>, %arg8: memref<1x4x256xf32, #tpu.memory_space<vmem>>) attributes {dimension_semantics = [#tpu.dimension_semantics<parallel>], iteration_bounds = array<i64: 2>, scalar_prefetch = 0 : i64, scratch_operands = 0 : i64, tpu.core_type = #tpu.core_type<tc>, window_params = [{transform_indices = @transform_0, window_bounds = array<i64: 1, 4, 16, 16>}, {pipeline_mode = #tpu.pipeline_mode<synchronous>, transform_indices = @transform_1, window_bounds = array<i64: 4, 12>}, {pipeline_mode = #tpu.pipeline_mode<synchronous>, transform_indices = @transform_2, window_bounds = array<i64: 4, 1>}, {pipeline_mode = #tpu.pipeline_mode<synchronous>, transform_indices = @transform_3, window_bounds = array<i64: 4, 12>}, {pipeline_mode = #tpu.pipeline_mode<synchronous>, transform_indices = @transform_4, window_bounds = array<i64: 4, 1>}, {pipeline_mode = #tpu.pipeline_mode<synchronous>, transform_indices = @transform_5, window_bounds = array<i64: 4, 4>}, {pipeline_mode = #tpu.pipeline_mode<synchronous>, transform_indices = @transform_6, window_bounds = array<i64: 4, 1>}, {transform_indices = @transform_7, window_bounds = array<i64: 1, 4, 256>}]} {
    %c0 = arith.constant 0 : index
    %c0_0 = arith.constant 0 : index
    %c0_1 = arith.constant 0 : index
    %c0_2 = arith.constant 0 : index
    %0 = vector.load %arg1[%c0, %c0_0, %c0_1, %c0_2] : memref<1x4x16x16xf32, #tpu.memory_space<vmem>>, vector<1x4x16x16xf32>
    %1 = vector.shape_cast %0 : vector<1x4x16x16xf32> to vector<4x16x16xf32>
    %cst = arith.constant dense<0.000000e+00> : vector<4x16xf32>
    %2 = vector.multi_reduction <add>, %1, %cst [2] : vector<4x16x16xf32> to vector<4x16xf32>
    %cst_3 = arith.constant 6.250000e-02 : f32
    %3 = vector.broadcast %cst_3 : f32 to vector<4x16xf32>
    %4 = arith.mulf %2, %3 : vector<4x16xf32>
    %cst_4 = arith.constant dense<0.000000e+00> : vector<4x16xf32>
    %5 = vector.multi_reduction <add>, %1, %cst_4 [1] : vector<4x16x16xf32> to vector<4x16xf32>
    %cst_5 = arith.constant 6.250000e-02 : f32
    %6 = vector.broadcast %cst_5 : f32 to vector<4x16xf32>
    %7 = arith.mulf %5, %6 : vector<4x16xf32>
    %cst_6 = arith.constant 0.000000e+00 : f32
    %8 = vector.broadcast %cst_6 : f32 to vector<4x1xf32>
    %9 = vector.extract_strided_slice %4 {offsets = [0, 0], sizes = [4, 15], strides = [1, 1]} : vector<4x16xf32> to vector<4x15xf32>
    %10 = tpu.concatenate %8, %9 in 1 : vector<4x1xf32>, vector<4x15xf32> -> vector<4x16xf32>
    %11 = vector.extract_strided_slice %4 {offsets = [0, 1], sizes = [4, 15], strides = [1, 1]} : vector<4x16xf32> to vector<4x15xf32>
    %12 = tpu.concatenate %11, %8 in 1 : vector<4x15xf32>, vector<4x1xf32> -> vector<4x16xf32>
    %13 = tpu.concatenate %10, %4, %12 in 0 : vector<4x16xf32>, vector<4x16xf32>, vector<4x16xf32> -> vector<12x16xf32>
    %14 = arith.truncf %13 : vector<12x16xf32> to vector<12x16xbf16>
    %c0_7 = arith.constant 0 : index
    %c0_8 = arith.constant 0 : index
    %15 = vector.load %arg2[%c0_7, %c0_8] : memref<4x12xbf16, #tpu.memory_space<vmem>>, vector<4x12xbf16>
    %cst_9 = arith.constant dense<0.000000e+00> : vector<4x16xf32>
    %16 = tpu.matmul %15, %14, %cst_9 {dimension_numbers = #tpu.dot_dimension_numbers<[1], [0], [0], [1], [0, 0, 1, 1], [], []>} : vector<4x12xbf16>, vector<12x16xbf16>, vector<4x16xf32> -> vector<4x16xf32>
    %c0_10 = arith.constant 0 : index
    %c0_11 = arith.constant 0 : index
    %17 = vector.load %arg3[%c0_10, %c0_11] : memref<4x1xf32, #tpu.memory_space<vmem>>, vector<4x1xf32>
    %18 = vector.broadcast %17 : vector<4x1xf32> to vector<4x16xf32>
    %19 = arith.addf %16, %18 : vector<4x16xf32>
    %20 = vector.extract_strided_slice %7 {offsets = [0, 0], sizes = [4, 15], strides = [1, 1]} : vector<4x16xf32> to vector<4x15xf32>
    %21 = tpu.concatenate %8, %20 in 1 : vector<4x1xf32>, vector<4x15xf32> -> vector<4x16xf32>
    %22 = vector.extract_strided_slice %7 {offsets = [0, 1], sizes = [4, 15], strides = [1, 1]} : vector<4x16xf32> to vector<4x15xf32>
    %23 = tpu.concatenate %22, %8 in 1 : vector<4x15xf32>, vector<4x1xf32> -> vector<4x16xf32>
    %24 = tpu.concatenate %21, %7, %23 in 0 : vector<4x16xf32>, vector<4x16xf32>, vector<4x16xf32> -> vector<12x16xf32>
    %25 = arith.truncf %24 : vector<12x16xf32> to vector<12x16xbf16>
    %c0_12 = arith.constant 0 : index
    %c0_13 = arith.constant 0 : index
    %26 = vector.load %arg4[%c0_12, %c0_13] : memref<4x12xbf16, #tpu.memory_space<vmem>>, vector<4x12xbf16>
    %cst_14 = arith.constant dense<0.000000e+00> : vector<4x16xf32>
    %27 = tpu.matmul %26, %25, %cst_14 {dimension_numbers = #tpu.dot_dimension_numbers<[1], [0], [0], [1], [0, 0, 1, 1], [], []>} : vector<4x12xbf16>, vector<12x16xbf16>, vector<4x16xf32> -> vector<4x16xf32>
    %c0_15 = arith.constant 0 : index
    %c0_16 = arith.constant 0 : index
    %28 = vector.load %arg5[%c0_15, %c0_16] : memref<4x1xf32, #tpu.memory_space<vmem>>, vector<4x1xf32>
    %29 = vector.broadcast %28 : vector<4x1xf32> to vector<4x16xf32>
    %30 = arith.addf %27, %29 : vector<4x16xf32>
    %31 = vector.shape_cast %19 : vector<4x16xf32> to vector<4x16x1xf32>
    %32 = vector.shape_cast %30 : vector<4x16xf32> to vector<4x1x16xf32>
    %33 = vector.broadcast %31 : vector<4x16x1xf32> to vector<4x16x16xf32>
    %34 = vector.broadcast %32 : vector<4x1x16xf32> to vector<4x16x16xf32>
    %35 = arith.addf %33, %34 : vector<4x16x16xf32>
    %cst_17 = arith.constant 0.000000e+00 : f32
    %36 = vector.broadcast %cst_17 : f32 to vector<4x16x16xf32>
    %37 = arith.maximumf %35, %36 : vector<4x16x16xf32>
    %38 = vector.shape_cast %37 : vector<4x16x16xf32> to vector<4x256xf32>
    %39 = arith.truncf %38 : vector<4x256xf32> to vector<4x256xbf16>
    %c0_18 = arith.constant 0 : index
    %c0_19 = arith.constant 0 : index
    %40 = vector.load %arg6[%c0_18, %c0_19] : memref<4x4xbf16, #tpu.memory_space<vmem>>, vector<4x4xbf16>
    %cst_20 = arith.constant dense<0.000000e+00> : vector<4x256xf32>
    %41 = tpu.matmul %40, %39, %cst_20 {dimension_numbers = #tpu.dot_dimension_numbers<[1], [0], [0], [1], [0, 0, 1, 1], [], []>} : vector<4x4xbf16>, vector<4x256xbf16>, vector<4x256xf32> -> vector<4x256xf32>
    %c0_21 = arith.constant 0 : index
    %c0_22 = arith.constant 0 : index
    %42 = vector.load %arg7[%c0_21, %c0_22] : memref<4x1xf32, #tpu.memory_space<vmem>>, vector<4x1xf32>
    %43 = vector.broadcast %42 : vector<4x1xf32> to vector<4x256xf32>
    %44 = arith.addf %41, %43 : vector<4x256xf32>
    %45 = arith.negf %44 : vector<4x256xf32>
    %46 = math.exp %45 : vector<4x256xf32>
    %cst_23 = arith.constant 1.000000e+00 : f32
    %47 = vector.broadcast %cst_23 : f32 to vector<4x256xf32>
    %48 = arith.addf %47, %46 : vector<4x256xf32>
    %49 = arith.divf %47, %48 : vector<4x256xf32>
    %50 = vector.shape_cast %1 : vector<4x16x16xf32> to vector<4x256xf32>
    %51 = arith.mulf %50, %49 : vector<4x256xf32>
    %c0_24 = arith.constant 0 : index
    %c0_25 = arith.constant 0 : index
    %c0_26 = arith.constant 0 : index
    %52 = vector.load %arg8[%c0_24, %c0_25, %c0_26] : memref<1x4x256xf32, #tpu.memory_space<vmem>>, vector<1x4x256xf32>
    %53 = vector.shape_cast %52 : vector<1x4x256xf32> to vector<4x256xf32>
    %54 = vector.shape_cast %51 : vector<4x256xf32> to vector<1x4x256xf32>
    tpu.vector_store %arg8[%c0_24, %c0_25, %c0_26], %54 {strides = array<i32>} : memref<1x4x256xf32, #tpu.memory_space<vmem>>, vector<1x4x256xf32>,
    return
  }
  func.func @transform_0(%arg0: i32) -> (i32, i32, i32, i32) {
    %c0_i32 = arith.constant 0 : i32
    %c0_i32_0 = arith.constant 0 : i32
    %c0_i32_1 = arith.constant 0 : i32
    %c0_i32_2 = arith.constant 0 : i32
    return %arg0, %c0_i32, %c0_i32_0, %c0_i32_1 : i32, i32, i32, i32
  }
  func.func @transform_1(%arg0: i32) -> (i32, i32) {
    %c0_i32 = arith.constant 0 : i32
    %c0_i32_0 = arith.constant 0 : i32
    %c0_i32_1 = arith.constant 0 : i32
    return %c0_i32, %c0_i32_0 : i32, i32
  }
  func.func @transform_2(%arg0: i32) -> (i32, i32) {
    %c0_i32 = arith.constant 0 : i32
    %c0_i32_0 = arith.constant 0 : i32
    %c0_i32_1 = arith.constant 0 : i32
    return %c0_i32, %c0_i32_0 : i32, i32
  }
  func.func @transform_3(%arg0: i32) -> (i32, i32) {
    %c0_i32 = arith.constant 0 : i32
    %c0_i32_0 = arith.constant 0 : i32
    %c0_i32_1 = arith.constant 0 : i32
    return %c0_i32, %c0_i32_0 : i32, i32
  }
  func.func @transform_4(%arg0: i32) -> (i32, i32) {
    %c0_i32 = arith.constant 0 : i32
    %c0_i32_0 = arith.constant 0 : i32
    %c0_i32_1 = arith.constant 0 : i32
    return %c0_i32, %c0_i32_0 : i32, i32
  }
  func.func @transform_5(%arg0: i32) -> (i32, i32) {
    %c0_i32 = arith.constant 0 : i32
    %c0_i32_0 = arith.constant 0 : i32
    %c0_i32_1 = arith.constant 0 : i32
    return %c0_i32, %c0_i32_0 : i32, i32
  }
  func.func @transform_6(%arg0: i32) -> (i32, i32) {
    %c0_i32 = arith.constant 0 : i32
    %c0_i32_0 = arith.constant 0 : i32
    %c0_i32_1 = arith.constant 0 : i32
    return %c0_i32, %c0_i32_0 : i32, i32
  }
  func.func @transform_7(%arg0: i32) -> (i32, i32, i32) {
    %c0_i32 = arith.constant 0 : i32
    %c0_i32_0 = arith.constant 0 : i32
    %c0_i32_1 = arith.constant 0 : i32
    return %arg0, %c0_i32, %c0_i32_0 : i32, i32, i32
  }
}

module attributes {stable_mosaic.version = 11 : i64} {
  func.func @_spblock_kernel(%arg0: i32, %arg1: memref<1x4x16x16xf32, #tpu.memory_space<vmem>>, %arg2: memref<4x12xbf16, #tpu.memory_space<vmem>>, %arg3: memref<4x1xf32, #tpu.memory_space<vmem>>, %arg4: memref<4x12xbf16, #tpu.memory_space<vmem>>, %arg5: memref<4x1xf32, #tpu.memory_space<vmem>>, %arg6: memref<4x4xbf16, #tpu.memory_space<vmem>>, %arg7: memref<4x1xf32, #tpu.memory_space<vmem>>, %arg8: memref<1x4x256xf32, #tpu.memory_space<vmem>>) attributes {dimension_semantics = [#tpu.dimension_semantics<parallel>], iteration_bounds = array<i64: 2>, scalar_prefetch = 0 : i64, scratch_operands = 0 : i64, tpu.core_type = #tpu.core_type<tc>, window_params = [{transform_indices = @transform_0, window_bounds = array<i64: 1, 4, 16, 16>}, {pipeline_mode = #tpu.pipeline_mode<synchronous>, transform_indices = @transform_1, window_bounds = array<i64: 4, 12>}, {pipeline_mode = #tpu.pipeline_mode<synchronous>, transform_indices = @transform_2, window_bounds = array<i64: 4, 1>}, {pipeline_mode = #tpu.pipeline_mode<synchronous>, transform_indices = @transform_3, window_bounds = array<i64: 4, 12>}, {pipeline_mode = #tpu.pipeline_mode<synchronous>, transform_indices = @transform_4, window_bounds = array<i64: 4, 1>}, {pipeline_mode = #tpu.pipeline_mode<synchronous>, transform_indices = @transform_5, window_bounds = array<i64: 4, 4>}, {pipeline_mode = #tpu.pipeline_mode<synchronous>, transform_indices = @transform_6, window_bounds = array<i64: 4, 1>}, {transform_indices = @transform_7, window_bounds = array<i64: 1, 4, 256>}]} {
    %c0 = arith.constant 0 : index
    %c0_0 = arith.constant 0 : index
    %c0_1 = arith.constant 0 : index
    %c0_2 = arith.constant 0 : index
    %0 = vector.load %arg1[%c0, %c0_0, %c0_1, %c0_2] : memref<1x4x16x16xf32, #tpu.memory_space<vmem>>, vector<1x4x16x16xf32>
    %1 = vector.shape_cast %0 : vector<1x4x16x16xf32> to vector<4x16x16xf32>
    %cst = arith.constant dense<0.000000e+00> : vector<4x16xf32>
    %2 = vector.multi_reduction <add>, %1, %cst [2] : vector<4x16x16xf32> to vector<4x16xf32>
    %cst_3 = arith.constant 6.250000e-02 : f32
    %3 = vector.broadcast %cst_3 : f32 to vector<4x16xf32>
    %4 = arith.mulf %2, %3 : vector<4x16xf32>
    %cst_4 = arith.constant dense<0.000000e+00> : vector<4x16xf32>
    %5 = vector.multi_reduction <add>, %1, %cst_4 [1] : vector<4x16x16xf32> to vector<4x16xf32>
    %cst_5 = arith.constant 6.250000e-02 : f32
    %6 = vector.broadcast %cst_5 : f32 to vector<4x16xf32>
    %7 = arith.mulf %5, %6 : vector<4x16xf32>
    %cst_6 = arith.constant 0.000000e+00 : f32
    %8 = vector.broadcast %cst_6 : f32 to vector<4x1xf32>
    %9 = vector.extract_strided_slice %4 {offsets = [0, 0], sizes = [4, 15], strides = [1, 1]} : vector<4x16xf32> to vector<4x15xf32>
    %10 = tpu.concatenate %8, %9 in 1 : vector<4x1xf32>, vector<4x15xf32> -> vector<4x16xf32>
    %11 = vector.extract_strided_slice %4 {offsets = [0, 1], sizes = [4, 15], strides = [1, 1]} : vector<4x16xf32> to vector<4x15xf32>
    %12 = tpu.concatenate %11, %8 in 1 : vector<4x15xf32>, vector<4x1xf32> -> vector<4x16xf32>
    %13 = tpu.concatenate %10, %4, %12 in 0 : vector<4x16xf32>, vector<4x16xf32>, vector<4x16xf32> -> vector<12x16xf32>
    %14 = arith.truncf %13 : vector<12x16xf32> to vector<12x16xbf16>
    %c0_7 = arith.constant 0 : index
    %c0_8 = arith.constant 0 : index
    %15 = vector.load %arg2[%c0_7, %c0_8] : memref<4x12xbf16, #tpu.memory_space<vmem>>, vector<4x12xbf16>
    %cst_9 = arith.constant dense<0.000000e+00> : vector<4x16xf32>
    %16 = tpu.matmul %15, %14, %cst_9 {dimension_numbers = #tpu.dot_dimension_numbers<[1], [0], [0], [1], [0, 0, 1, 1], [], []>} : vector<4x12xbf16>, vector<12x16xbf16>, vector<4x16xf32> -> vector<4x16xf32>
    %c0_10 = arith.constant 0 : index
    %c0_11 = arith.constant 0 : index
    %17 = vector.load %arg3[%c0_10, %c0_11] : memref<4x1xf32, #tpu.memory_space<vmem>>, vector<4x1xf32>
    %18 = vector.broadcast %17 : vector<4x1xf32> to vector<4x16xf32>
    %19 = arith.addf %16, %18 : vector<4x16xf32>
    %20 = vector.extract_strided_slice %7 {offsets = [0, 0], sizes = [4, 15], strides = [1, 1]} : vector<4x16xf32> to vector<4x15xf32>
    %21 = tpu.concatenate %8, %20 in 1 : vector<4x1xf32>, vector<4x15xf32> -> vector<4x16xf32>
    %22 = vector.extract_strided_slice %7 {offsets = [0, 1], sizes = [4, 15], strides = [1, 1]} : vector<4x16xf32> to vector<4x15xf32>
    %23 = tpu.concatenate %22, %8 in 1 : vector<4x15xf32>, vector<4x1xf32> -> vector<4x16xf32>
    %24 = tpu.concatenate %21, %7, %23 in 0 : vector<4x16xf32>, vector<4x16xf32>, vector<4x16xf32> -> vector<12x16xf32>
    %25 = arith.truncf %24 : vector<12x16xf32> to vector<12x16xbf16>
    %c0_12 = arith.constant 0 : index
    %c0_13 = arith.constant 0 : index
    %26 = vector.load %arg4[%c0_12, %c0_13] : memref<4x12xbf16, #tpu.memory_space<vmem>>, vector<4x12xbf16>
    %cst_14 = arith.constant dense<0.000000e+00> : vector<4x16xf32>
    %27 = tpu.matmul %26, %25, %cst_14 {dimension_numbers = #tpu.dot_dimension_numbers<[1], [0], [0], [1], [0, 0, 1, 1], [], []>} : vector<4x12xbf16>, vector<12x16xbf16>, vector<4x16xf32> -> vector<4x16xf32>
    %c0_15 = arith.constant 0 : index
    %c0_16 = arith.constant 0 : index
    %28 = vector.load %arg5[%c0_15, %c0_16] : memref<4x1xf32, #tpu.memory_space<vmem>>, vector<4x1xf32>
    %29 = vector.broadcast %28 : vector<4x1xf32> to vector<4x16xf32>
    %30 = arith.addf %27, %29 : vector<4x16xf32>
    %31 = vector.shape_cast %19 : vector<4x16xf32> to vector<4x16x1xf32>
    %32 = vector.shape_cast %30 : vector<4x16xf32> to vector<4x1x16xf32>
    %33 = vector.broadcast %31 : vector<4x16x1xf32> to vector<4x16x16xf32>
    %34 = vector.broadcast %32 : vector<4x1x16xf32> to vector<4x16x16xf32>
    %35 = arith.addf %33, %34 : vector<4x16x16xf32>
    %cst_17 = arith.constant 0.000000e+00 : f32
    %36 = vector.broadcast %cst_17 : f32 to vector<4x16x16xf32>
    %37 = arith.maximumf %35, %36 : vector<4x16x16xf32>
    %38 = vector.shape_cast %37 : vector<4x16x16xf32> to vector<4x256xf32>
    %39 = arith.truncf %38 : vector<4x256xf32> to vector<4x256xbf16>
    %c0_18 = arith.constant 0 : index
    %c0_19 = arith.constant 0 : index
    %40 = vector.load %arg6[%c0_18, %c0_19] : memref<4x4xbf16, #tpu.memory_space<vmem>>, vector<4x4xbf16>
    %cst_20 = arith.constant dense<0.000000e+00> : vector<4x256xf32>
    %41 = tpu.matmul %40, %39, %cst_20 {dimension_numbers = #tpu.dot_dimension_numbers<[1], [0], [0], [1], [0, 0, 1, 1], [], []>} : vector<4x4xbf16>, vector<4x256xbf16>, vector<4x256xf32> -> vector<4x256xf32>
    %c0_21 = arith.constant 0 : index
    %c0_22 = arith.constant 0 : index
    %42 = vector.load %arg7[%c0_21, %c0_22] : memref<4x1xf32, #tpu.memory_space<vmem>>, vector<4x1xf32>
    %43 = vector.broadcast %42 : vector<4x1xf32> to vector<4x256xf32>
    %44 = arith.addf %41, %43 : vector<4x256xf32>
    %45 = arith.negf %44 : vector<4x256xf32>
    %46 = math.exp %45 : vector<4x256xf32>
    %cst_23 = arith.constant 1.000000e+00 : f32
    %47 = vector.broadcast %cst_23 : f32 to vector<4x256xf32>
    %48 = arith.addf %47, %46 : vector<4x256xf32>
    %49 = arith.divf %47, %48 : vector<4x256xf32>
    %50 = vector.shape_cast %1 : vector<4x16x16xf32> to vector<4x256xf32>
    %51 = arith.mulf %50, %49 : vector<4x256xf32>
    %c0_24 = arith.constant 0 : index
    %c0_25 = arith.constant 0 : index
    %c0_26 = arith.constant 0 : index
    %52 = vector.load %arg8[%c0_24, %c0_25, %c0_26] : memref<1x4x256xf32, #tpu.memory_space<vmem>>, vector<1x4x256xf32>
    %53 = vector.shape_cast %52 : vector<1x4x256xf32> to vector<4x256xf32>
    %54 = vector.shape_cast %51 : vector<4x256xf32> to vector<1x4x256xf32>
    tpu.vector_store %arg8[%c0_24, %c0_25, %c0_26], %54 {strides = array<i32>} : memref<1x4x256xf32, #tpu.memory_space<vmem>>, vector<1x4x256xf32>,
    return
  }
  func.func @transform_0(%arg0: i32) -> (i32, i32, i32, i32) {
    %c0_i32 = arith.constant 0 : i32
    %c0_i32_0 = arith.constant 0 : i32
    %c0_i32_1 = arith.constant 0 : i32
    %c0_i32_2 = arith.constant 0 : i32
    return %arg0, %c0_i32, %c0_i32_0, %c0_i32_1 : i32, i32, i32, i32
  }
  func.func @transform_1(%arg0: i32) -> (i32, i32) {
    %c0_i32 = arith.constant 0 : i32
    %c0_i32_0 = arith.constant 0 : i32
    %c0_i32_1 = arith.constant 0 : i32
    return %c0_i32, %c0_i32_0 : i32, i32
  }
  func.func @transform_2(%arg0: i32) -> (i32, i32) {
    %c0_i32 = arith.constant 0 : i32
    %c0_i32_0 = arith.constant 0 : i32
    %c0_i32_1 = arith.constant 0 : i32
    return %c0_i32, %c0_i32_0 : i32, i32
  }
  func.func @transform_3(%arg0: i32) -> (i32, i32) {
    %c0_i32 = arith.constant 0 : i32
    %c0_i32_0 = arith.constant 0 : i32
    %c0_i32_1 = arith.constant 0 : i32
    return %c0_i32, %c0_i32_0 : i32, i32
  }
  func.func @transform_4(%arg0: i32) -> (i32, i32) {
    %c0_i32 = arith.constant 0 : i32
    %c0_i32_0 = arith.constant 0 : i32
    %c0_i32_1 = arith.constant 0 : i32
    return %c0_i32, %c0_i32_0 : i32, i32
  }
  func.func @transform_5(%arg0: i32) -> (i32, i32) {
    %c0_i32 = arith.constant 0 : i32
    %c0_i32_0 = arith.constant 0 : i32
    %c0_i32_1 = arith.constant 0 : i32
    return %c0_i32, %c0_i32_0 : i32, i32
  }
  func.func @transform_6(%arg0: i32) -> (i32, i32) {
    %c0_i32 = arith.constant 0 : i32
    %c0_i32_0 = arith.constant 0 : i32
    %c0_i32_1 = arith.constant 0 : i32
    return %c0_i32, %c0_i32_0 : i32, i32
  }
  func.func @transform_7(%arg0: i32) -> (i32, i32, i32) {
    %c0_i32 = arith.constant 0 : i32
    %c0_i32_0 = arith.constant 0 : i32
    %c0_i32_1 = arith.constant 0 : i32
    return %arg0, %c0_i32, %c0_i32_0 : i32, i32, i32
  }
}

</mosaic_0001>

<llo_original>
// kernel: tpu_custom_call.1
$region0: #{tpu_custom_call.1}
  #allocation0 [shape = 'u32[]', space=smem, size = 0x4, offset = 0x4, fixed_abs, tag = 'smem constant byte address 0x4 - core index']
  #allocation1 [shape = 'u32[144,128]{1,0:T(1,128)}', space=vmem, size = 0x12000, scoped, tag = 'internal scratch']
  %s0 = inlined_call_operand.hbm [shape: f32[2,4,16,16], index: 0, kind: input, shape index: {}]
  %s1 = inlined_call_operand.vmem [shape: bf16[4,12], index: 1, kind: input, shape index: {}]
  %s2 = inlined_call_operand.vmem [shape: f32[4,1], index: 2, kind: input, shape index: {}]
  %s3 = inlined_call_operand.vmem [shape: bf16[4,12], index: 3, kind: input, shape index: {}]
  %s4 = inlined_call_operand.vmem [shape: f32[4,1], index: 4, kind: input, shape index: {}]
  %s5 = inlined_call_operand.vmem [shape: bf16[4,4], index: 5, kind: input, shape index: {}]
  %s6 = inlined_call_operand.vmem [shape: f32[4,1], index: 6, kind: input, shape index: {}]
  %s7 = inlined_call_operand.hbm [shape: f32[2,4,256], index: 7, kind: output, shape index: {}]
  %s8 = sld [smem:[#allocation0]]
  $region65: #{tpu_custom_call.1} parent=0
    _
  %s10 = ssub.s32 1, %s8
  %s11 = scalar_select 0, %s10, %s8
  $region1: #{tpu_custom_call.1} parent=0
    #allocation2 [shape = 'u8[65536]{0}', space=vmem, size = 0x10000, scoped, tag = 'input window, operand 0']
    #allocation3 [shape = 's32[2]{0}', space=sflag, size = 0x8, scoped, tag = 'scoped memory for tpu_custom_call.1']
    #allocation4 [shape = 's32[2]{0}', space=sflag, size = 0x8, scoped, tag = 'scoped memory for tpu_custom_call.1']
    #allocation5 [shape = 'u8[8192]{0}', space=vmem, size = 0x2000, scoped, tag = 'output window, operand 0']
    %12 = vsyncpa [#allocation3], 0
    %s13 = scalar_lea.sflag [#allocation3], 1
    %14 = vsyncpa %s13, 0
    %15 = vsyncpa [#allocation4], 0
    %s16 = scalar_lea.sflag [#allocation4], 1
    %17 = vsyncpa %s16, 0
    loop: start=0, step=1, limit=4
    $region2: #{tpu_custom_call.1} parent=1 // loop_pre_header
      _
    $region3: #{tpu_custom_call.1} parent=1 // loop_header
      %s19 = sphi 0, %s23
      %p20 = scmp.ge.s32.totalorder %s19, 4
      %s29 = sphi 0, %s31
      %s32 = sphi 0, %s29
      %s33 = sphi 0, %s32
      %s49 = sphi 0, %s33
      %s53 = sphi 0, %s53
      %s55 = sphi 0, %s53
      %s56 = sphi 0, %s55
      %s70 = sphi 0, %s56
      %s74 = sphi 0, %s74
      %s76 = sphi 0, %s74
      %s77 = sphi 0, %s76
      %s91 = sphi 0, %s77
      %s95 = sphi 0, %s95
      %s97 = sphi 0, %s95
      %s98 = sphi 0, %s97
      %s112 = sphi 0, %s98
      %s116 = sphi 0, %s116
      %s118 = sphi 0, %s116
      %s119 = sphi 0, %s118
      %s133 = sphi 0, %s119
      %s137 = sphi 0, %s137
      %s139 = sphi 0, %s137
      %s140 = sphi 0, %s139
      %s154 = sphi 0, %s140
      %s158 = sphi 0, %s158
      %s160 = sphi 0, %s158
      %s161 = sphi 0, %s160
      %s175 = sphi 0, %s161
      %s181 = sphi 0, %s183
      %s184 = sphi 0, %s181
      %s185 = sphi 0, %s184
      %s201 = sphi 0, %s185
    $region4: #{tpu_custom_call.1} parent=1 // loop_header_branch
      %22 = sbr.rel (%p20) target = $region8
    $region5: #{tpu_custom_call.1} parent=1 // loop_body
      %s24 = ssub.s32 %s19, 1
      %s25 = ssub.s32 %s19, 2
      %s26 = sadd.s32 %s19, 1
      %s27 = ssub.s32 %s19, %s26
      %p28 = scmp.eq.s32.totalorder %s27, 0
      %s30 = sadd.s32 %s29, 1
      %s31 = scalar_select %p28, %s29, %s30
      %p34 = pneg %p28
      %p35 = scmp.eq.s32.totalorder %s19, 1
      %p36 = por %p34, %p35
      %p37 = scmp.ne.s32.totalorder %s29, %s32
      %p38 = scmp.eq.s32.totalorder %s19, 0
      %p39 = por %p37, %p38
      %p40 = scmp.ne.s32.totalorder %s29, %s32
      %p41 = scmp.eq.s32.totalorder %s24, 1
      %p42 = por %p40, %p41
      %p43 = scmp.ne.s32.totalorder %s32, %s33
      %p44 = scmp.eq.s32.totalorder %s24, 0
      %p45 = por %p43, %p44
      %p46 = scmp.ne.s32.totalorder %s32, %s33
      %p47 = scmp.eq.s32.totalorder %s25, 1
      %p48 = por %p46, %p47
      %p50 = scmp.ne.s32.totalorder %s33, %s49
      %p51 = scmp.eq.s32.totalorder %s25, 0
      %p52 = por %p50, %p51
      %s54 = sadd.s32 %s53, 1
      %p57 = scmp.eq.s32.totalorder %s19, 1
      %p58 = scmp.ne.s32.totalorder %s53, %s55
      %p59 = scmp.eq.s32.totalorder %s19, 0
      %p60 = por %p58, %p59
      %p61 = scmp.ne.s32.totalorder %s53, %s55
      %p62 = scmp.eq.s32.totalorder %s24, 1
      %p63 = por %p61, %p62
      %p64 = scmp.ne.s32.totalorder %s55, %s56
      %p65 = scmp.eq.s32.totalorder %s24, 0
      %p66 = por %p64, %p65
      %p67 = scmp.ne.s32.totalorder %s55, %s56
      %p68 = scmp.eq.s32.totalorder %s25, 1
      %p69 = por %p67, %p68
      %p71 = scmp.ne.s32.totalorder %s56, %s70
      %p72 = scmp.eq.s32.totalorder %s25, 0
      %p73 = por %p71, %p72
      %s75 = sadd.s32 %s74, 1
      %p78 = scmp.eq.s32.totalorder %s19, 1
      %p79 = scmp.ne.s32.totalorder %s74, %s76
      %p80 = scmp.eq.s32.totalorder %s19, 0
      %p81 = por %p79, %p80
      %p82 = scmp.ne.s32.totalorder %s74, %s76
      %p83 = scmp.eq.s32.totalorder %s24, 1
      %p84 = por %p82, %p83
      %p85 = scmp.ne.s32.totalorder %s76, %s77
      %p86 = scmp.eq.s32.totalorder %s24, 0
      %p87 = por %p85, %p86
      %p88 = scmp.ne.s32.totalorder %s76, %s77
      %p89 = scmp.eq.s32.totalorder %s25, 1
      %p90 = por %p88, %p89
      %p92 = scmp.ne.s32.totalorder %s77, %s91
      %p93 = scmp.eq.s32.totalorder %s25, 0
      %p94 = por %p92, %p93
      %s96 = sadd.s32 %s95, 1
      %p99 = scmp.eq.s32.totalorder %s19, 1
      %p100 = scmp.ne.s32.totalorder %s95, %s97
      %p101 = scmp.eq.s32.totalorder %s19, 0
      %p102 = por %p100, %p101
      %p103 = scmp.ne.s32.totalorder %s95, %s97
      %p104 = scmp.eq.s32.totalorder %s24, 1
      %p105 = por %p103, %p104
      %p106 = scmp.ne.s32.totalorder %s97, %s98
      %p107 = scmp.eq.s32.totalorder %s24, 0
      %p108 = por %p106, %p107
      %p109 = scmp.ne.s32.totalorder %s97, %s98
      %p110 = scmp.eq.s32.totalorder %s25, 1
      %p111 = por %p109, %p110
      %p113 = scmp.ne.s32.totalorder %s98, %s112
      %p114 = scmp.eq.s32.totalorder %s25, 0
      %p115 = por %p113, %p114
      %s117 = sadd.s32 %s116, 1
      %p120 = scmp.eq.s32.totalorder %s19, 1
      %p121 = scmp.ne.s32.totalorder %s116, %s118
      %p122 = scmp.eq.s32.totalorder %s19, 0
      %p123 = por %p121, %p122
      %p124 = scmp.ne.s32.totalorder %s116, %s118
      %p125 = scmp.eq.s32.totalorder %s24, 1
      %p126 = por %p124, %p125
      %p127 = scmp.ne.s32.totalorder %s118, %s119
      %p128 = scmp.eq.s32.totalorder %s24, 0
      %p129 = por %p127, %p128
      %p130 = scmp.ne.s32.totalorder %s118, %s119
      %p131 = scmp.eq.s32.totalorder %s25, 1
      %p132 = por %p130, %p131
      %p134 = scmp.ne.s32.totalorder %s119, %s133
      %p135 = scmp.eq.s32.totalorder %s25, 0
      %p136 = por %p134, %p135
      %s138 = sadd.s32 %s137, 1
      %p141 = scmp.eq.s32.totalorder %s19, 1
      %p142 = scmp.ne.s32.totalorder %s137, %s139
      %p143 = scmp.eq.s32.totalorder %s19, 0
      %p144 = por %p142, %p143
      %p145 = scmp.ne.s32.totalorder %s137, %s139
      %p146 = scmp.eq.s32.totalorder %s24, 1
      %p147 = por %p145, %p146
      %p148 = scmp.ne.s32.totalorder %s139, %s140
      %p149 = scmp.eq.s32.totalorder %s24, 0
      %p150 = por %p148, %p149
      %p151 = scmp.ne.s32.totalorder %s139, %s140
      %p152 = scmp.eq.s32.totalorder %s25, 1
      %p153 = por %p151, %p152
      %p155 = scmp.ne.s32.totalorder %s140, %s154
      %p156 = scmp.eq.s32.totalorder %s25, 0
      %p157 = por %p155, %p156
      %s159 = sadd.s32 %s158, 1
      %p162 = scmp.eq.s32.totalorder %s19, 1
      %p163 = scmp.ne.s32.totalorder %s158, %s160
      %p164 = scmp.eq.s32.totalorder %s19, 0
      %p165 = por %p163, %p164
      %p166 = scmp.ne.s32.totalorder %s158, %s160
      %p167 = scmp.eq.s32.totalorder %s24, 1
      %p168 = por %p166, %p167
      %p169 = scmp.ne.s32.totalorder %s160, %s161
      %p170 = scmp.eq.s32.totalorder %s24, 0
      %p171 = por %p169, %p170
      %p172 = scmp.ne.s32.totalorder %s160, %s161
      %p173 = scmp.eq.s32.totalorder %s25, 1
      %p174 = por %p172, %p173
      %p176 = scmp.ne.s32.totalorder %s161, %s175
      %p177 = scmp.eq.s32.totalorder %s25, 0
      %p178 = por %p176, %p177
      %s179 = ssub.s32 %s19, %s26
      %p180 = scmp.eq.s32.totalorder %s179, 0
      %s182 = sadd.s32 %s181, 1
      %s183 = scalar_select %p180, %s181, %s182
      %p186 = pneg %p180
      %p187 = scmp.eq.s32.totalorder %s19, 1
      %p188 = por %p186, %p187
      %p189 = scmp.ne.s32.totalorder %s181, %s184
      %p190 = scmp.eq.s32.totalorder %s19, 0
      %p191 = por %p189, %p190
      %p192 = scmp.ne.s32.totalorder %s181, %s184
      %p193 = scmp.eq.s32.totalorder %s24, 1
      %p194 = por %p192, %p193
      %p195 = scmp.ne.s32.totalorder %s184, %s185
      %p196 = scmp.eq.s32.totalorder %s24, 0
      %p197 = por %p195, %p196
      %p198 = scmp.ne.s32.totalorder %s184, %s185
      %p199 = scmp.eq.s32.totalorder %s25, 1
      %p200 = por %p198, %p199
      %p202 = scmp.ne.s32.totalorder %s185, %s201
      %p203 = scmp.eq.s32.totalorder %s25, 0
      %p204 = por %p202, %p203
      %p205 = scmp.le.s32.totalorder 1, %s19
      %p206 = scmp.lt.s32.totalorder %s19, 3
      %p207 = pnand %p205, %p206
      %p208 = pneg %p207
      // Predicated region
      $region9: #{tpu_custom_call.1} parent=5 // pred_check
        _
      $region10: #{tpu_custom_call.1} parent=5 // pred_check_branch
        %210 = sbr.rel (%p207) target = $region12
      $region11: #{tpu_custom_call.1} parent=5 // pred_region
        %s211 = ssub.s32 %s19, 1
        // Predicated region
        $region13: #{tpu_custom_call.1} parent=11 // pred_check
          %p212 = pneg %p66
        $region14: #{tpu_custom_call.1} parent=11 // pred_check_branch
          %214 = sbr.rel (%p212) target = $region16
        $region15: #{tpu_custom_call.1} parent=11 // pred_region
          _
        $region16: #{tpu_custom_call.1} parent=11 // pred_fallthru
          _
        // Predicated region
        $region17: #{tpu_custom_call.1} parent=11 // pred_check
          %p215 = pneg %p87
        $region18: #{tpu_custom_call.1} parent=11 // pred_check_branch
          %217 = sbr.rel (%p215) target = $region20
        $region19: #{tpu_custom_call.1} parent=11 // pred_region
          _
        $region20: #{tpu_custom_call.1} parent=11 // pred_fallthru
          _
        // Predicated region
        $region21: #{tpu_custom_call.1} parent=11 // pred_check
          %p218 = pneg %p108
        $region22: #{tpu_custom_call.1} parent=11 // pred_check_branch
          %220 = sbr.rel (%p218) target = $region24
        $region23: #{tpu_custom_call.1} parent=11 // pred_region
          _
        $region24: #{tpu_custom_call.1} parent=11 // pred_fallthru
          _
        // Predicated region
        $region25: #{tpu_custom_call.1} parent=11 // pred_check
          %p221 = pneg %p129
        $region26: #{tpu_custom_call.1} parent=11 // pred_check_branch
          %223 = sbr.rel (%p221) target = $region28
        $region27: #{tpu_custom_call.1} parent=11 // pred_region
          _
        $region28: #{tpu_custom_call.1} parent=11 // pred_fallthru
          _
        // Predicated region
        $region29: #{tpu_custom_call.1} parent=11 // pred_check
          %p224 = pneg %p150
        $region30: #{tpu_custom_call.1} parent=11 // pred_check_branch
          %226 = sbr.rel (%p224) target = $region32
        $region31: #{tpu_custom_call.1} parent=11 // pred_region
          _
        $region32: #{tpu_custom_call.1} parent=11 // pred_fallthru
          _
        // Predicated region
        $region33: #{tpu_custom_call.1} parent=11 // pred_check
          %p227 = pneg %p171
        $region34: #{tpu_custom_call.1} parent=11 // pred_check_branch
          %229 = sbr.rel (%p227) target = $region36
        $region35: #{tpu_custom_call.1} parent=11 // pred_region
          _
        $region36: #{tpu_custom_call.1} parent=11 // pred_fallthru
          _
      $region12: #{tpu_custom_call.1} parent=5 // pred_fallthru
        _
      %p230 = scmp.lt.s32.totalorder %s19, 2
      // Predicated region
      $region37: #{tpu_custom_call.1} parent=5 // pred_check
        %p231 = pneg %p230
      $region38: #{tpu_custom_call.1} parent=5 // pred_check_branch
        %233 = sbr.rel (%p231) target = $region40
      $region39: #{tpu_custom_call.1} parent=5 // pred_region
        // Predicated region
        $region41: #{tpu_custom_call.1} parent=39 // pred_check
          %p234 = pneg %p39
        $region42: #{tpu_custom_call.1} parent=39 // pred_check_branch
          %236 = sbr.rel (%p234) target = $region44
        $region43: #{tpu_custom_call.1} parent=39 // pred_region
          %s237 = sand.u32 %s29, 1
          %s238 = scalar_lea.sflag [#allocation3], %s237
          %s239 = sand.u32 %s29, 1
          %s240 = smul.addr %s239, 64
          %s241 = scalar_lea.vmem [#allocation2], %s240
          %s243 = ssub.s32 1024, 1024
          %244 = vsyncadd %s238, %s243
          %s245 = smul.addr %s19, 8
          %s246 = smul.addr %s245, 128
          %s247 = scalar_lea.hbm %s0, %s246
          %s248 = sshll.u32 %s241, 4
          %s249 = int_to_ptr.vmem [resolvable:$true] %s248
          %254 = dma.hbm_to_vmem [thread:$0]  %s247, 1024, %s249, %s238, 128, 128, 8
        $region44: #{tpu_custom_call.1} parent=39 // pred_fallthru
          _
      $region40: #{tpu_custom_call.1} parent=5 // pred_fallthru
        _
      %p255 = scmp.le.s32.totalorder 1, %s19
      %p256 = scmp.lt.s32.totalorder %s19, 3
      %p257 = pnand %p255, %p256
      %p258 = pneg %p257
      // Predicated region
      $region45: #{tpu_custom_call.1} parent=5 // pred_check
        _
      $region46: #{tpu_custom_call.1} parent=5 // pred_check_branch
        %260 = sbr.rel (%p257) target = $region48
      $region47: #{tpu_custom_call.1} parent=5 // pred_region
        %s261 = ssub.s32 %s19, 1
        %s262 = sand.u32 %s32, 1
        %s263 = scalar_lea.sflag [#allocation3], %s262
        %s264 = sand.u32 %s32, 1
        %s265 = smul.addr %s264, 64
        %s266 = scalar_lea.vmem [#allocation2], %s265
        // Predicated region
        $region49: #{tpu_custom_call.1} parent=47 // pred_check
          %p267 = pneg %p45
        $region50: #{tpu_custom_call.1} parent=47 // pred_check_branch
          %269 = sbr.rel (%p267) target = $region52
        $region51: #{tpu_custom_call.1} parent=47 // pred_region
          %270 = dma.done %s263, 1024
        $region52: #{tpu_custom_call.1} parent=47 // pred_fallthru
          _
        %s271 = sand.u32 %s32, 1
        %s272 = scalar_lea.sflag [#allocation3], %s271
        %s273 = sand.u32 %s32, 1
        %s274 = smul.addr %s273, 64
        %s275 = scalar_lea.vmem [#allocation2], %s274
        %p276 = pneg %p45
        %p277 = pneg %p42
        %p278 = pneg %p66
        %p279 = pneg %p63
        %p280 = pneg %p87
        %p281 = pneg %p84
        %p282 = pneg %p108
        %p283 = pneg %p105
        %p284 = pneg %p129
        %p285 = pneg %p126
        %p286 = pneg %p150
        %p287 = pneg %p147
        %p288 = pneg %p171
        %p289 = pneg %p168
        %p290 = pneg %p197
        %p291 = pneg %p194
        %s292 = sand.u32 %s184, 1
        %s293 = scalar_lea.sflag [#allocation4], %s292
        %s294 = sand.u32 %s184, 1
        %s295 = smul.addr %s294, 8
        %s296 = scalar_lea.vmem [#allocation5], %s295
        %v298 = vld [vmem:[%s266] sm:$0xff]
        %v299 = vld [vmem:[%s266 + $0x8] sm:$0xff]
        %v300 = vld [vmem:[%s266 + $0x10] sm:$0xff]
        %v301 = vld [vmem:[%s266 + $0x18] sm:$0xff]
        %v302 = vld [vmem:[%s266 + $0x20] sm:$0xff]
        %v303 = vld [vmem:[%s266 + $0x28] sm:$0xff]
        %v304 = vld [vmem:[%s266 + $0x30] sm:$0xff]
        %v305 = vld [vmem:[%s266 + $0x38] sm:$0xff]
        %vm306 = vcmask 130048
        %v307 = vsel %vm306, %v298, 0.0
        %308 = vadd.xlane.f32.xlu0 %v307
        %v309 = vpop.xlane.xlu0 %308
        %v310 = vsel %vm306, %v299, 0.0
        %311 = vadd.xlane.f32.xlu0 %v310
        %v312 = vpop.xlane.xlu0 %311
        %v313 = vsel %vm306, %v300, 0.0
        %314 = vadd.xlane.f32.xlu0 %v313
        %v315 = vpop.xlane.xlu0 %314
        %v316 = vsel %vm306, %v301, 0.0
        %317 = vadd.xlane.f32.xlu0 %v316
        %v318 = vpop.xlane.xlu0 %317
        %v319 = vsel %vm306, %v302, 0.0
        %320 = vadd.xlane.f32.xlu0 %v319
        %v321 = vpop.xlane.xlu0 %320
        %v322 = vsel %vm306, %v303, 0.0
        %323 = vadd.xlane.f32.xlu0 %v322
        %v324 = vpop.xlane.xlu0 %323
        %v325 = vsel %vm306, %v304, 0.0
        %326 = vadd.xlane.f32.xlu0 %v325
        %v327 = vpop.xlane.xlu0 %326
        %v328 = vsel %vm306, %v305, 0.0
        %329 = vadd.xlane.f32.xlu0 %v328
        %v330 = vpop.xlane.xlu0 %329
        %v331 = vmul.f32 %v309, 0.0625
        %v332 = vmul.f32 %v312, 0.0625
        %v333 = vmul.f32 %v315, 0.0625
        %v334 = vmul.f32 %v318, 0.0625
        %v335 = vmul.f32 %v321, 0.0625
        %v336 = vmul.f32 %v324, 0.0625
        %v337 = vmul.f32 %v327, 0.0625
        %v338 = vmul.f32 %v330, 0.0625
        %v339 = vadd.f32 %v307, %v310
        %v340 = vrot.slane %v339, 4
        %v341 = vadd.f32 %v339, %v340
        %v342 = vrot.slane %v341, 2
        %v343 = vadd.f32 %v341, %v342
        %v344 = vrot.slane %v343, 1
        %v345 = vadd.f32 %v343, %v344
        %v346 = vadd.f32 %v313, %v316
        %v347 = vrot.slane %v346, 4
        %v348 = vadd.f32 %v346, %v347
        %v349 = vrot.slane %v348, 2
        %v350 = vadd.f32 %v348, %v349
        %v351 = vrot.slane %v350, 1
        %v352 = vadd.f32 %v350, %v351
        %v353 = vadd.f32 %v319, %v322
        %v354 = vrot.slane %v353, 4
        %v355 = vadd.f32 %v353, %v354
        %v356 = vrot.slane %v355, 2
        %v357 = vadd.f32 %v355, %v356
        %v358 = vrot.slane %v357, 1
        %v359 = vadd.f32 %v357, %v358
        %v360 = vadd.f32 %v325, %v328
        %v361 = vrot.slane %v360, 4
        %v362 = vadd.f32 %v360, %v361
        %v363 = vrot.slane %v362, 2
        %v364 = vadd.f32 %v362, %v363
        %v365 = vrot.slane %v364, 1
        %v366 = vadd.f32 %v364, %v365
        %v367 = vmul.f32 %v345, 0.0625
        %v368 = vmul.f32 %v352, 0.0625
        %v369 = vmul.f32 %v359, 0.0625
        %v370 = vmul.f32 %v366, 0.0625
        %v379 = vlaneseq
        %v380 = vand.u32 %v379, 127
        %v381 = vadd.s32 %v380, 4294967295
        %v382 = vlaneseq
        %v383 = vshrl.u32 %v382, 7
        %v384 = vsub.s32 %v381, %v383
        %v385 = vrot.slane %v331, %v384
        %v386 = vadd.s32 %v380, 4294967287
        %v387 = vlaneseq
        %v388 = vshrl.u32 %v387, 7
        %v389 = vsub.s32 %v386, %v388
        %v390 = vrot.slane %v332, %v389
        %vm391 = vcmask 138312
        %v392 = vsel %vm391, %v390, %v385
        %v393 = vlaneseq
        %v394 = vshrl.u32 %v393, 7
        %v395 = vsub.s32 %v381, %v394
        %v396 = vrot.slane %v333, %v395
        %v397 = vlaneseq
        %v398 = vshrl.u32 %v397, 7
        %v399 = vsub.s32 %v386, %v398
        %v400 = vrot.slane %v334, %v399
        %v401 = vsel %vm391, %v400, %v396
        %v402 = vlaneseq
        %v403 = vshrl.u32 %v402, 7
        %v404 = vsub.s32 %v381, %v403
        %v405 = vrot.slane %v335, %v404
        %v406 = vlaneseq
        %v407 = vshrl.u32 %v406, 7
        %v408 = vsub.s32 %v386, %v407
        %v409 = vrot.slane %v336, %v408
        %v410 = vsel %vm391, %v409, %v405
        %v411 = vlaneseq
        %v412 = vshrl.u32 %v411, 7
        %v413 = vsub.s32 %v381, %v412
        %v414 = vrot.slane %v337, %v413
        %v415 = vlaneseq
        %v416 = vshrl.u32 %v415, 7
        %v417 = vsub.s32 %v386, %v416
        %v418 = vrot.slane %v338, %v417
        %v419 = vsel %vm391, %v418, %v414
        %vm420 = vcmask 1041409
        %v421 = vsel %vm420, %v401, %v392
        %vm422 = vcmask 1042434
        %v423 = vsel %vm422, %v410, %v421
        %vm424 = vcmask 1043459
        %v425 = vsel %vm424, %v419, %v423
        %vm427 = vcmask 7168
        %v428 = vsel %vm427, 0.0, %v425
        %v429 = vadd.s32 %v380, 1
        %v430 = vlaneseq
        %v431 = vshrl.u32 %v430, 7
        %v432 = vsub.s32 %v429, %v431
        %v433 = vrot.slane %v331, %v432
        %v434 = vadd.s32 %v380, 4294967289
        %v435 = vlaneseq
        %v436 = vshrl.u32 %v435, 7
        %v437 = vsub.s32 %v434, %v436
        %v438 = vrot.slane %v332, %v437
        %vm439 = vcmask 121912
        %v440 = vsel %vm439, %v438, %v433
        %v441 = vlaneseq
        %v442 = vshrl.u32 %v441, 7
        %v443 = vsub.s32 %v429, %v442
        %v444 = vrot.slane %v333, %v443
        %v445 = vlaneseq
        %v446 = vshrl.u32 %v445, 7
        %v447 = vsub.s32 %v434, %v446
        %v448 = vrot.slane %v334, %v447
        %v449 = vsel %vm439, %v448, %v444
        %v450 = vlaneseq
        %v451 = vshrl.u32 %v450, 7
        %v452 = vsub.s32 %v429, %v451
        %v453 = vrot.slane %v335, %v452
        %v454 = vlaneseq
        %v455 = vshrl.u32 %v454, 7
        %v456 = vsub.s32 %v434, %v455
        %v457 = vrot.slane %v336, %v456
        %v458 = vsel %vm439, %v457, %v453
        %v459 = vlaneseq
        %v460 = vshrl.u32 %v459, 7
        %v461 = vsub.s32 %v429, %v460
        %v462 = vrot.slane %v337, %v461
        %v463 = vlaneseq
        %v464 = vshrl.u32 %v463, 7
        %v465 = vsub.s32 %v434, %v464
        %v466 = vrot.slane %v338, %v465
        %v467 = vsel %vm439, %v466, %v462
        %v468 = vsel %vm422, %v449, %v440
        %v469 = vsel %vm424, %v458, %v468
        %vm470 = vcmask 1044484
        %v471 = vsel %vm470, %v467, %v469
        %vm473 = vcmask 121856
        %v474 = vsel %vm473, %v471, 0.0
        %v475 = vlaneseq
        %v476 = vshrl.u32 %v475, 7
        %v477 = vsub.s32 %v380, %v476
        %v478 = vrot.slane %v331, %v477
        %v479 = vadd.s32 %v380, 4294967288
        %v480 = vlaneseq
        %v481 = vshrl.u32 %v480, 7
        %v482 = vsub.s32 %v479, %v481
        %v483 = vrot.slane %v332, %v482
        %vm484 = vcmask 130112
        %v485 = vsel %vm484, %v483, %v478
        %v486 = vlaneseq
        %v487 = vshrl.u32 %v486, 7
        %v488 = vsub.s32 %v380, %v487
        %v489 = vrot.slane %v333, %v488
        %v490 = vlaneseq
        %v491 = vshrl.u32 %v490, 7
        %v492 = vsub.s32 %v479, %v491
        %v493 = vrot.slane %v334, %v492
        %v494 = vsel %vm484, %v493, %v489
        %v495 = vlaneseq
        %v496 = vshrl.u32 %v495, 7
        %v497 = vsub.s32 %v380, %v496
        %v498 = vrot.slane %v335, %v497
        %v499 = vlaneseq
        %v500 = vshrl.u32 %v499, 7
        %v501 = vsub.s32 %v479, %v500
        %v502 = vrot.slane %v336, %v501
        %v503 = vsel %vm484, %v502, %v498
        %v504 = vlaneseq
        %v505 = vshrl.u32 %v504, 7
        %v506 = vsub.s32 %v380, %v505
        %v507 = vrot.slane %v337, %v506
        %v508 = vlaneseq
        %v509 = vshrl.u32 %v508, 7
        %v510 = vsub.s32 %v479, %v509
        %v511 = vrot.slane %v338, %v510
        %v512 = vsel %vm484, %v511, %v507
        %vm513 = vcmask 1045509
        %v514 = vsel %vm513, %v494, %v485
        %vm515 = vcmask 1046534
        %v516 = vsel %vm515, %v503, %v514
        %vm517 = vcmask 1047559
        %v518 = vsel %vm517, %v512, %v516
        %v521 = vrot.slane %v474, 1
        %vm523 = vcmask 1043456
        %v524 = vsel %vm523, %v428, %v518
        %v525 = vpack.c.bf16 %v521, %v524
        %v526 = vld [vmem:[%s1] sm:$0x3]
        %v527 = vld [vmem:[%s2] sm:$0xf]
        %529 = vset.pattern.permute.xlu0 0
        %530 = vperm.xlu0 %529, %v527
        %v531 = vpop.permute.xlu0 %530
        %vm533 = vcmask 97280
        %v535 = vsel %vm533, %v526, 0
        %vm537 = vcmask 1045504
        %v539 = vsel %vm537, %v525, 0
        %541 = vmatprep.subr.bf16.mxu0 0
        %542 = vmatpush1.bf16.msra.mxu0 %v539
        %543 = vmatprep.subr.bf16.mxu0 0
        %544 = vmatpush1.bf16.msra.mxu0 0
        %545 = vmatprep.subr.bf16.mxu0 0
        %546 = vmatpush1.bf16.msra.mxu0 0
        %547 = vmatprep.subr.bf16.mxu0 0
        %548 = vmatpush1.bf16.msra.mxu0 0
        %549 = vmatprep.subr.bf16.mxu0 0
        %550 = vmatpush1.bf16.msra.mxu0 0
        %551 = vmatprep.subr.bf16.mxu0 0
        %552 = vmatpush1.bf16.msra.mxu0 0
        %553 = vmatprep.subr.bf16.mxu0 0
        %554 = vmatpush1.bf16.msra.mxu0 0
        %555 = vmatprep.subr.bf16.mxu0 0
        %556 = vmatpush1.bf16.msra.mxu0 0
        %557 = vmatprep.subr.bf16.mxu0 0
        %558 = vmatpush1.bf16.msra.mxu0 0
        %559 = vmatprep.subr.bf16.mxu0 0
        %560 = vmatpush1.bf16.msra.mxu0 0
        %561 = vmatprep.subr.bf16.mxu0 0
        %562 = vmatpush1.bf16.msra.mxu0 0
        %563 = vmatprep.subr.bf16.mxu0 0
        %564 = vmatpush1.bf16.msra.mxu0 0
        %565 = vmatprep.subr.bf16.mxu0 0
        %566 = vmatpush1.bf16.msra.mxu0 0
        %567 = vmatprep.subr.bf16.mxu0 0
        %568 = vmatpush1.bf16.msra.mxu0 0
        %569 = vmatprep.subr.bf16.mxu0 0
        %570 = vmatpush1.bf16.msra.mxu0 0
        %571 = vmatprep.subr.bf16.mxu0 0
        %572 = vmatpush1.bf16.msra.mxu0 0
        %573 = vmatprep.mubr.bf16.mxu0 0
        %574 = vmatmul.mubr.bf16.gmra.mrb[0].mxu0 %v535
        %v575 = vpop.f32.mrb[0].mxu0
        %v576 = vadd.f32 %v531, %v575
        %v577 = vpop.f32.mrb[0].mxu0
        %v578 = vpop.f32.mrb[0].mxu0
        %v579 = vpop.f32.mrb[0].mxu0
        %580 = vdwg.mxu0
        %v585 = vsel %vm420, %v368, %v367
        %v586 = vsel %vm422, %v369, %v585
        %v587 = vsel %vm424, %v370, %v586
        %588 = vrot.lane.b32.xlu0 %v587, 1
        %v589 = vpop.permute.xlu0 %588
        %v591 = vsel %vm427, 0.0, %v589
        %592 = vrot.lane.b32.xlu0 %v587, 127
        %v593 = vpop.permute.xlu0 %592
        %v595 = vsel %vm473, %v593, 0.0
        %v596 = vsel %vm513, %v368, %v367
        %v597 = vsel %vm515, %v369, %v596
        %v598 = vsel %vm517, %v370, %v597
        %v600 = vsel %vm523, %v591, %v598
        %v601 = vpack.c.bf16 %v595, %v600
        %v602 = vld [vmem:[%s3] sm:$0x3]
        %v603 = vld [vmem:[%s4] sm:$0xf]
        %605 = vset.pattern.permute.xlu0 0
        %606 = vperm.xlu0 %605, %v603
        %v607 = vpop.permute.xlu0 %606
        %v610 = vsel %vm533, %v602, 0
        %v613 = vsel %vm537, %v601, 0
        %615 = vmatprep.subr.bf16.mxu0 0
        %616 = vmatpush1.bf16.msra.mxu0 %v613
        %617 = vmatprep.subr.bf16.mxu0 0
        %618 = vmatpush1.bf16.msra.mxu0 0
        %619 = vmatprep.subr.bf16.mxu0 0
        %620 = vmatpush1.bf16.msra.mxu0 0
        %621 = vmatprep.subr.bf16.mxu0 0
        %622 = vmatpush1.bf16.msra.mxu0 0
        %623 = vmatprep.subr.bf16.mxu0 0
        %624 = vmatpush1.bf16.msra.mxu0 0
        %625 = vmatprep.subr.bf16.mxu0 0
        %626 = vmatpush1.bf16.msra.mxu0 0
        %627 = vmatprep.subr.bf16.mxu0 0
        %628 = vmatpush1.bf16.msra.mxu0 0
        %629 = vmatprep.subr.bf16.mxu0 0
        %630 = vmatpush1.bf16.msra.mxu0 0
        %631 = vmatprep.subr.bf16.mxu0 0
        %632 = vmatpush1.bf16.msra.mxu0 0
        %633 = vmatprep.subr.bf16.mxu0 0
        %634 = vmatpush1.bf16.msra.mxu0 0
        %635 = vmatprep.subr.bf16.mxu0 0
        %636 = vmatpush1.bf16.msra.mxu0 0
        %637 = vmatprep.subr.bf16.mxu0 0
        %638 = vmatpush1.bf16.msra.mxu0 0
        %639 = vmatprep.subr.bf16.mxu0 0
        %640 = vmatpush1.bf16.msra.mxu0 0
        %641 = vmatprep.subr.bf16.mxu0 0
        %642 = vmatpush1.bf16.msra.mxu0 0
        %643 = vmatprep.subr.bf16.mxu0 0
        %644 = vmatpush1.bf16.msra.mxu0 0
        %645 = vmatprep.subr.bf16.mxu0 0
        %646 = vmatpush1.bf16.msra.mxu0 0
        %647 = vmatprep.mubr.bf16.mxu0 0
        %648 = vmatmul.mubr.bf16.gmra.mrb[0].mxu0 %v610
        %v649 = vpop.f32.mrb[0].mxu0
        %v650 = vadd.f32 %v607, %v649
        %v651 = vpop.f32.mrb[0].mxu0
        %v652 = vpop.f32.mrb[0].mxu0
        %v653 = vpop.f32.mrb[0].mxu0
        %654 = vdwg.mxu0
        %v655 = vlaneseq
        %v656 = vshrl.u32 %v655, 7
        %v657 = vsub.s32 0, %v656
        %v658 = vrot.slane %v576, %v657
        %660 = vbcast.lane.b32.xlu0 %v658, 256
        %v661 = vpop.permute.xlu0 %660
        %s663 = sor.u32 256, 8
        %664 = vbcast.lane.b32.xlu0 %v658, %s663
        %v665 = vpop.permute.xlu0 %664
        %v666 = vlaneseq
        %v667 = vshrl.u32 %v666, 7
        %v668 = vsub.s32 1, %v667
        %v669 = vrot.slane %v576, %v668
        %671 = vbcast.lane.b32.xlu0 %v669, 256
        %v672 = vpop.permute.xlu0 %671
        %s674 = sor.u32 256, 8
        %675 = vbcast.lane.b32.xlu0 %v669, %s674
        %v676 = vpop.permute.xlu0 %675
        %v677 = vlaneseq
        %v678 = vshrl.u32 %v677, 7
        %v679 = vsub.s32 2, %v678
        %v680 = vrot.slane %v576, %v679
        %682 = vbcast.lane.b32.xlu0 %v680, 256
        %v683 = vpop.permute.xlu0 %682
        %s685 = sor.u32 256, 8
        %686 = vbcast.lane.b32.xlu0 %v680, %s685
        %v687 = vpop.permute.xlu0 %686
        %v688 = vlaneseq
        %v689 = vshrl.u32 %v688, 7
        %v690 = vsub.s32 3, %v689
        %v691 = vrot.slane %v576, %v690
        %693 = vbcast.lane.b32.xlu0 %v691, 256
        %v694 = vpop.permute.xlu0 %693
        %s696 = sor.u32 256, 8
        %697 = vbcast.lane.b32.xlu0 %v691, %s696
        %v698 = vpop.permute.xlu0 %697
        %v701 = vunpack.c.l.s4 1966171168
        %v702 = vunpack.c.0.s8 %v701
        %v703 = vlaneseq
        %v704 = vshrl.u32 %v703, 7
        %v705 = vsub.s32 %v702, %v704
        %v706 = vrot.slane %v650, %v705
        %v707 = vcombine.high %v706, %v706
        %v709 = vunpack.c.l.s4 1966171168
        %v710 = vunpack.c.0.s8 %v709
        %v711 = vlaneseq
        %v712 = vshrl.u32 %v711, 7
        %v713 = vsub.s32 %v710, %v712
        %v714 = vrot.slane %v706, %v713
        %v716 = vunpack.c.l.s4 1966171168
        %v717 = vunpack.c.0.s8 %v716
        %v718 = vlaneseq
        %v719 = vshrl.u32 %v718, 7
        %v720 = vsub.s32 %v717, %v719
        %v721 = vrot.slane %v707, %v720
        %v722 = vcombine.high %v714, %v714
        %v723 = vcombine.high %v721, %v721
        %v724 = vlaneseq
        %v725 = vshrl.u32 %v724, 7
        %v726 = vsub.s32 0, %v725
        %v727 = vrot.slane %v714, %v726
        %v728 = vlaneseq
        %v729 = vshrl.u32 %v728, 7
        %v730 = vsub.s32 0, %v729
        %v731 = vrot.slane %v721, %v730
        %v732 = vlaneseq
        %v733 = vshrl.u32 %v732, 7
        %v734 = vsub.s32 0, %v733
        %v735 = vrot.slane %v722, %v734
        %v736 = vlaneseq
        %v737 = vshrl.u32 %v736, 7
        %v738 = vsub.s32 0, %v737
        %v739 = vrot.slane %v723, %v738
        %v744 = vadd.f32 %v661, %v727
        %v745 = vadd.f32 %v665, %v727
        %v746 = vadd.f32 %v672, %v731
        %v747 = vadd.f32 %v676, %v731
        %v748 = vadd.f32 %v683, %v735
        %v749 = vadd.f32 %v687, %v735
        %v750 = vadd.f32 %v694, %v739
        %v751 = vadd.f32 %v698, %v739
        %v752 = vmax.f32 %v744, 0.0
        %v753 = vmax.f32 %v745, 0.0
        %v754 = vmax.f32 %v746, 0.0
        %v755 = vmax.f32 %v747, 0.0
        %v756 = vmax.f32 %v748, 0.0
        %v757 = vmax.f32 %v749, 0.0
        %v758 = vmax.f32 %v750, 0.0
        %v759 = vmax.f32 %v751, 0.0
        %v760 = vcombine.low %v752, %v756
        %v761 = vcombine.high %v752, %v756
        %v763 = vunpack.c.l.s4 1983009808
        %v764 = vunpack.c.0.s8 %v763
        %v765 = vlaneseq
        %v766 = vshrl.u32 %v765, 7
        %v767 = vsub.s32 %v764, %v766
        %v768 = vrot.slane %v760, %v767
        %v770 = vunpack.c.l.s4 1983009808
        %v771 = vunpack.c.0.s8 %v770
        %v772 = vlaneseq
        %v773 = vshrl.u32 %v772, 7
        %v774 = vsub.s32 %v771, %v773
        %v775 = vrot.slane %v761, %v774
        %v776 = vcombine.low %v754, %v758
        %v777 = vcombine.high %v754, %v758
        %v779 = vunpack.c.l.s4 1983009808
        %v780 = vunpack.c.0.s8 %v779
        %v781 = vlaneseq
        %v782 = vshrl.u32 %v781, 7
        %v783 = vsub.s32 %v780, %v782
        %v784 = vrot.slane %v776, %v783
        %v786 = vunpack.c.l.s4 1983009808
        %v787 = vunpack.c.0.s8 %v786
        %v788 = vlaneseq
        %v789 = vshrl.u32 %v788, 7
        %v790 = vsub.s32 %v787, %v789
        %v791 = vrot.slane %v777, %v790
        %v792 = vcombine.low %v768, %v784
        %v793 = vcombine.high %v768, %v784
        %v795 = vunpack.c.l.s4 1934713408
        %v796 = vunpack.c.0.s8 %v795
        %v797 = vlaneseq
        %v798 = vshrl.u32 %v797, 7
        %v799 = vsub.s32 %v796, %v798
        %v800 = vrot.slane %v792, %v799
        %v802 = vunpack.c.l.s4 1934713408
        %v803 = vunpack.c.0.s8 %v802
        %v804 = vlaneseq
        %v805 = vshrl.u32 %v804, 7
        %v806 = vsub.s32 %v803, %v805
        %v807 = vrot.slane %v793, %v806
        %v808 = vcombine.low %v775, %v791
        %v809 = vcombine.high %v775, %v791
        %v811 = vunpack.c.l.s4 1934713408
        %v812 = vunpack.c.0.s8 %v811
        %v813 = vlaneseq
        %v814 = vshrl.u32 %v813, 7
        %v815 = vsub.s32 %v812, %v814
        %v816 = vrot.slane %v808, %v815
        %v818 = vunpack.c.l.s4 1934713408
        %v819 = vunpack.c.0.s8 %v818
        %v820 = vlaneseq
        %v821 = vshrl.u32 %v820, 7
        %v822 = vsub.s32 %v819, %v821
        %v823 = vrot.slane %v809, %v822
        %v824 = vcombine.high %v800, 0.0
        %v825 = vcombine.high %v807, 0.0
        %v826 = vcombine.high %v816, 0.0
        %v827 = vcombine.high %v823, 0.0
        %v828 = vcombine.low %v753, %v757
        %v829 = vcombine.high %v753, %v757
        %v831 = vunpack.c.l.s4 1983009808
        %v832 = vunpack.c.0.s8 %v831
        %v833 = vlaneseq
        %v834 = vshrl.u32 %v833, 7
        %v835 = vsub.s32 %v832, %v834
        %v836 = vrot.slane %v828, %v835
        %v838 = vunpack.c.l.s4 1983009808
        %v839 = vunpack.c.0.s8 %v838
        %v840 = vlaneseq
        %v841 = vshrl.u32 %v840, 7
        %v842 = vsub.s32 %v839, %v841
        %v843 = vrot.slane %v829, %v842
        %v844 = vcombine.low %v755, %v759
        %v845 = vcombine.high %v755, %v759
        %v847 = vunpack.c.l.s4 1983009808
        %v848 = vunpack.c.0.s8 %v847
        %v849 = vlaneseq
        %v850 = vshrl.u32 %v849, 7
        %v851 = vsub.s32 %v848, %v850
        %v852 = vrot.slane %v844, %v851
        %v854 = vunpack.c.l.s4 1983009808
        %v855 = vunpack.c.0.s8 %v854
        %v856 = vlaneseq
        %v857 = vshrl.u32 %v856, 7
        %v858 = vsub.s32 %v855, %v857
        %v859 = vrot.slane %v845, %v858
        %v860 = vcombine.low %v836, %v852
        %v861 = vcombine.high %v836, %v852
        %v863 = vunpack.c.l.s4 1934713408
        %v864 = vunpack.c.0.s8 %v863
        %v865 = vlaneseq
        %v866 = vshrl.u32 %v865, 7
        %v867 = vsub.s32 %v864, %v866
        %v868 = vrot.slane %v860, %v867
        %v870 = vunpack.c.l.s4 1934713408
        %v871 = vunpack.c.0.s8 %v870
        %v872 = vlaneseq
        %v873 = vshrl.u32 %v872, 7
        %v874 = vsub.s32 %v871, %v873
        %v875 = vrot.slane %v861, %v874
        %v876 = vcombine.low %v843, %v859
        %v877 = vcombine.high %v843, %v859
        %v879 = vunpack.c.l.s4 1934713408
        %v880 = vunpack.c.0.s8 %v879
        %v881 = vlaneseq
        %v882 = vshrl.u32 %v881, 7
        %v883 = vsub.s32 %v880, %v882
        %v884 = vrot.slane %v876, %v883
        %v886 = vunpack.c.l.s4 1934713408
        %v887 = vunpack.c.0.s8 %v886
        %v888 = vlaneseq
        %v889 = vshrl.u32 %v888, 7
        %v890 = vsub.s32 %v887, %v889
        %v891 = vrot.slane %v877, %v890
        %v892 = vcombine.high %v868, 0.0
        %v893 = vcombine.high %v875, 0.0
        %v894 = vcombine.high %v884, 0.0
        %v895 = vcombine.high %v891, 0.0
        %897 = vrot.lane.b32.xlu0 %v824, 16
        %v898 = vpop.permute.xlu0 %897
        %901 = vrot.lane.b32.xlu0 %v807, 32
        %v902 = vpop.permute.xlu0 %901
        %905 = vrot.lane.b32.xlu0 %v825, 48
        %v906 = vpop.permute.xlu0 %905
        %909 = vrot.lane.b32.xlu0 %v816, 64
        %v910 = vpop.permute.xlu0 %909
        %913 = vrot.lane.b32.xlu0 %v826, 80
        %v914 = vpop.permute.xlu0 %913
        %917 = vrot.lane.b32.xlu0 %v823, 96
        %v918 = vpop.permute.xlu0 %917
        %921 = vrot.lane.b32.xlu0 %v827, 112
        %v922 = vpop.permute.xlu0 %921
        %925 = vrot.lane.b32.xlu0 %v892, 16
        %v926 = vpop.permute.xlu0 %925
        %929 = vrot.lane.b32.xlu0 %v875, 32
        %v930 = vpop.permute.xlu0 %929
        %933 = vrot.lane.b32.xlu0 %v893, 48
        %v934 = vpop.permute.xlu0 %933
        %937 = vrot.lane.b32.xlu0 %v884, 64
        %v938 = vpop.permute.xlu0 %937
        %941 = vrot.lane.b32.xlu0 %v894, 80
        %v942 = vpop.permute.xlu0 %941
        %945 = vrot.lane.b32.xlu0 %v891, 96
        %v946 = vpop.permute.xlu0 %945
        %949 = vrot.lane.b32.xlu0 %v895, 112
        %v950 = vpop.permute.xlu0 %949
        %v952 = vsel %vm306, %v800, %v898
        %vm953 = vcmask 261120
        %v954 = vsel %vm953, %v952, %v902
        %vm955 = vcmask 392192
        %v956 = vsel %vm955, %v954, %v906
        %vm957 = vcmask 523264
        %v958 = vsel %vm957, %v956, %v910
        %vm959 = vcmask 654336
        %v960 = vsel %vm959, %v958, %v914
        %vm961 = vcmask 785408
        %v962 = vsel %vm961, %v960, %v918
        %vm963 = vcmask 916480
        %v964 = vsel %vm963, %v962, %v922
        %v965 = vsel %vm306, %v868, %v926
        %v966 = vsel %vm953, %v965, %v930
        %v967 = vsel %vm955, %v966, %v934
        %v968 = vsel %vm957, %v967, %v938
        %v969 = vsel %vm959, %v968, %v942
        %v970 = vsel %vm961, %v969, %v946
        %v971 = vsel %vm963, %v970, %v950
        %v972 = vpack.c.bf16 %v964, %v964
        %v973 = vpack.c.bf16 %v971, %v971
        %v974 = vld [vmem:[%s5] sm:$0x3]
        %v975 = vld [vmem:[%s6] sm:$0xf]
        %977 = vset.pattern.permute.xlu0 0
        %978 = vperm.xlu0 %977, %v975
        %v979 = vpop.permute.xlu0 %978
        %vm981 = vcmask 31744
        %v983 = vsel %vm981, %v974, 0
        %vm985 = vcmask 1041408
        %v987 = vsel %vm985, %v972, 0
        %v990 = vsel %vm985, %v973, 0
        %992 = vmatprep.subr.bf16.mxu0 %v990
        %993 = vmatpush1.bf16.msra.mxu0 %v987
        %994 = vmatprep.subr.bf16.mxu0 0
        %995 = vmatpush1.bf16.msra.mxu0 0
        %996 = vmatprep.subr.bf16.mxu0 0
        %997 = vmatpush1.bf16.msra.mxu0 0
        %998 = vmatprep.subr.bf16.mxu0 0
        %999 = vmatpush1.bf16.msra.mxu0 0
        %1000 = vmatprep.subr.bf16.mxu0 0
        %1001 = vmatpush1.bf16.msra.mxu0 0
        %1002 = vmatprep.subr.bf16.mxu0 0
        %1003 = vmatpush1.bf16.msra.mxu0 0
        %1004 = vmatprep.subr.bf16.mxu0 0
        %1005 = vmatpush1.bf16.msra.mxu0 0
        %1006 = vmatprep.subr.bf16.mxu0 0
        %1007 = vmatpush1.bf16.msra.mxu0 0
        %1008 = vmatprep.subr.bf16.mxu0 0
        %1009 = vmatpush1.bf16.msra.mxu0 0
        %1010 = vmatprep.subr.bf16.mxu0 0
        %1011 = vmatpush1.bf16.msra.mxu0 0
        %1012 = vmatprep.subr.bf16.mxu0 0
        %1013 = vmatpush1.bf16.msra.mxu0 0
        %1014 = vmatprep.subr.bf16.mxu0 0
        %1015 = vmatpush1.bf16.msra.mxu0 0
        %1016 = vmatprep.subr.bf16.mxu0 0
        %1017 = vmatpush1.bf16.msra.mxu0 0
        %1018 = vmatprep.subr.bf16.mxu0 0
        %1019 = vmatpush1.bf16.msra.mxu0 0
        %1020 = vmatprep.subr.bf16.mxu0 0
        %1021 = vmatpush1.bf16.msra.mxu0 0
        %1022 = vmatprep.subr.bf16.mxu0 0
        %1023 = vmatpush1.bf16.msra.mxu0 0
        %1024 = vmatprep.mubr.bf16.mxu0 0
        %1025 = vmatmul.mubr.bf16.gmra.mrb[0].mxu0 %v983
        %v1026 = vpop.f32.mrb[0].mxu0
        %v1027 = vadd.f32 %v979, %v1026
        %v1028 = vpop.f32.mrb[0].mxu0
        %v1029 = vadd.f32 %v979, %v1028
        %v1030 = vpop.f32.mrb[0].mxu0
        %v1031 = vpop.f32.mrb[0].mxu0
        %1032 = vdwg.mxu0
        %v1033 = vxor.u32 %v1027, 2147483648
        %v1034 = vxor.u32 %v1029, 2147483648
        %v1035 = vmul.f32 %v1033, 1.442695
        %v1036 = vpow.pop %v1035
        %v1037 = vmul.f32 %v1034, 1.442695
        %v1038 = vpow.pop %v1037
        %v1039 = vadd.f32 %v1036, 1.0
        %v1040 = vadd.f32 %v1038, 1.0
        %v1041 = vrcp.pop %v1039
        %v1042 = vmul.f32 1.0, %v1041
        %v1043 = vrcp.pop %v1040
        %v1044 = vmul.f32 1.0, %v1043
        %v1045 = vcombine.low %v298, %v302
        %v1046 = vcombine.high %v298, %v302
        %v1048 = vunpack.c.l.s4 1983009808
        %v1049 = vunpack.c.0.s8 %v1048
        %v1050 = vlaneseq
        %v1051 = vshrl.u32 %v1050, 7
        %v1052 = vsub.s32 %v1049, %v1051
        %v1053 = vrot.slane %v1045, %v1052
        %v1055 = vunpack.c.l.s4 1983009808
        %v1056 = vunpack.c.0.s8 %v1055
        %v1057 = vlaneseq
        %v1058 = vshrl.u32 %v1057, 7
        %v1059 = vsub.s32 %v1056, %v1058
        %v1060 = vrot.slane %v1046, %v1059
        %v1061 = vcombine.low %v300, %v304
        %v1062 = vcombine.high %v300, %v304
        %v1064 = vunpack.c.l.s4 1983009808
        %v1065 = vunpack.c.0.s8 %v1064
        %v1066 = vlaneseq
        %v1067 = vshrl.u32 %v1066, 7
        %v1068 = vsub.s32 %v1065, %v1067
        %v1069 = vrot.slane %v1061, %v1068
        %v1071 = vunpack.c.l.s4 1983009808
        %v1072 = vunpack.c.0.s8 %v1071
        %v1073 = vlaneseq
        %v1074 = vshrl.u32 %v1073, 7
        %v1075 = vsub.s32 %v1072, %v1074
        %v1076 = vrot.slane %v1062, %v1075
        %v1077 = vcombine.low %v1053, %v1069
        %v1078 = vcombine.high %v1053, %v1069
        %v1080 = vunpack.c.l.s4 1934713408
        %v1081 = vunpack.c.0.s8 %v1080
        %v1082 = vlaneseq
        %v1083 = vshrl.u32 %v1082, 7
        %v1084 = vsub.s32 %v1081, %v1083
        %v1085 = vrot.slane %v1077, %v1084
        %v1087 = vunpack.c.l.s4 1934713408
        %v1088 = vunpack.c.0.s8 %v1087
        %v1089 = vlaneseq
        %v1090 = vshrl.u32 %v1089, 7
        %v1091 = vsub.s32 %v1088, %v1090
        %v1092 = vrot.slane %v1078, %v1091
        %v1093 = vcombine.low %v1060, %v1076
        %v1094 = vcombine.high %v1060, %v1076
        %v1096 = vunpack.c.l.s4 1934713408
        %v1097 = vunpack.c.0.s8 %v1096
        %v1098 = vlaneseq
        %v1099 = vshrl.u32 %v1098, 7
        %v1100 = vsub.s32 %v1097, %v1099
        %v1101 = vrot.slane %v1093, %v1100
        %v1103 = vunpack.c.l.s4 1934713408
        %v1104 = vunpack.c.0.s8 %v1103
        %v1105 = vlaneseq
        %v1106 = vshrl.u32 %v1105, 7
        %v1107 = vsub.s32 %v1104, %v1106
        %v1108 = vrot.slane %v1094, %v1107
        %v1109 = vcombine.high %v1085, 0.0
        %v1110 = vcombine.high %v1092, 0.0
        %v1111 = vcombine.high %v1101, 0.0
        %v1112 = vcombine.high %v1108, 0.0
        %v1113 = vcombine.low %v299, %v303
        %v1114 = vcombine.high %v299, %v303
        %v1116 = vunpack.c.l.s4 1983009808
        %v1117 = vunpack.c.0.s8 %v1116
        %v1118 = vlaneseq
        %v1119 = vshrl.u32 %v1118, 7
        %v1120 = vsub.s32 %v1117, %v1119
        %v1121 = vrot.slane %v1113, %v1120
        %v1123 = vunpack.c.l.s4 1983009808
        %v1124 = vunpack.c.0.s8 %v1123
        %v1125 = vlaneseq
        %v1126 = vshrl.u32 %v1125, 7
        %v1127 = vsub.s32 %v1124, %v1126
        %v1128 = vrot.slane %v1114, %v1127
        %v1129 = vcombine.low %v301, %v305
        %v1130 = vcombine.high %v301, %v305
        %v1132 = vunpack.c.l.s4 1983009808
        %v1133 = vunpack.c.0.s8 %v1132
        %v1134 = vlaneseq
        %v1135 = vshrl.u32 %v1134, 7
        %v1136 = vsub.s32 %v1133, %v1135
        %v1137 = vrot.slane %v1129, %v1136
        %v1139 = vunpack.c.l.s4 1983009808
        %v1140 = vunpack.c.0.s8 %v1139
        %v1141 = vlaneseq
        %v1142 = vshrl.u32 %v1141, 7
        %v1143 = vsub.s32 %v1140, %v1142
        %v1144 = vrot.slane %v1130, %v1143
        %v1145 = vcombine.low %v1121, %v1137
        %v1146 = vcombine.high %v1121, %v1137
        %v1148 = vunpack.c.l.s4 1934713408
        %v1149 = vunpack.c.0.s8 %v1148
        %v1150 = vlaneseq
        %v1151 = vshrl.u32 %v1150, 7
        %v1152 = vsub.s32 %v1149, %v1151
        %v1153 = vrot.slane %v1145, %v1152
        %v1155 = vunpack.c.l.s4 1934713408
        %v1156 = vunpack.c.0.s8 %v1155
        %v1157 = vlaneseq
        %v1158 = vshrl.u32 %v1157, 7
        %v1159 = vsub.s32 %v1156, %v1158
        %v1160 = vrot.slane %v1146, %v1159
        %v1161 = vcombine.low %v1128, %v1144
        %v1162 = vcombine.high %v1128, %v1144
        %v1164 = vunpack.c.l.s4 1934713408
        %v1165 = vunpack.c.0.s8 %v1164
        %v1166 = vlaneseq
        %v1167 = vshrl.u32 %v1166, 7
        %v1168 = vsub.s32 %v1165, %v1167
        %v1169 = vrot.slane %v1161, %v1168
        %v1171 = vunpack.c.l.s4 1934713408
        %v1172 = vunpack.c.0.s8 %v1171
        %v1173 = vlaneseq
        %v1174 = vshrl.u32 %v1173, 7
        %v1175 = vsub.s32 %v1172, %v1174
        %v1176 = vrot.slane %v1162, %v1175
        %v1177 = vcombine.high %v1153, 0.0
        %v1178 = vcombine.high %v1160, 0.0
        %v1179 = vcombine.high %v1169, 0.0
        %v1180 = vcombine.high %v1176, 0.0
        %1182 = vrot.lane.b32.xlu0 %v1109, 16
        %v1183 = vpop.permute.xlu0 %1182
        %1186 = vrot.lane.b32.xlu0 %v1092, 32
        %v1187 = vpop.permute.xlu0 %1186
        %1190 = vrot.lane.b32.xlu0 %v1110, 48
        %v1191 = vpop.permute.xlu0 %1190
        %1194 = vrot.lane.b32.xlu0 %v1101, 64
        %v1195 = vpop.permute.xlu0 %1194
        %1198 = vrot.lane.b32.xlu0 %v1111, 80
        %v1199 = vpop.permute.xlu0 %1198
        %1202 = vrot.lane.b32.xlu0 %v1108, 96
        %v1203 = vpop.permute.xlu0 %1202
        %1206 = vrot.lane.b32.xlu0 %v1112, 112
        %v1207 = vpop.permute.xlu0 %1206
        %1210 = vrot.lane.b32.xlu0 %v1177, 16
        %v1211 = vpop.permute.xlu0 %1210
        %1214 = vrot.lane.b32.xlu0 %v1160, 32
        %v1215 = vpop.permute.xlu0 %1214
        %1218 = vrot.lane.b32.xlu0 %v1178, 48
        %v1219 = vpop.permute.xlu0 %1218
        %1222 = vrot.lane.b32.xlu0 %v1169, 64
        %v1223 = vpop.permute.xlu0 %1222
        %1226 = vrot.lane.b32.xlu0 %v1179, 80
        %v1227 = vpop.permute.xlu0 %1226
        %1230 = vrot.lane.b32.xlu0 %v1176, 96
        %v1231 = vpop.permute.xlu0 %1230
        %1234 = vrot.lane.b32.xlu0 %v1180, 112
        %v1235 = vpop.permute.xlu0 %1234
        %v1237 = vsel %vm306, %v1085, %v1183
        %v1238 = vsel %vm953, %v1237, %v1187
        %v1239 = vsel %vm955, %v1238, %v1191
        %v1240 = vsel %vm957, %v1239, %v1195
        %v1241 = vsel %vm959, %v1240, %v1199
        %v1242 = vsel %vm961, %v1241, %v1203
        %v1243 = vsel %vm963, %v1242, %v1207
        %v1244 = vsel %vm306, %v1153, %v1211
        %v1245 = vsel %vm953, %v1244, %v1215
        %v1246 = vsel %vm955, %v1245, %v1219
        %v1247 = vsel %vm957, %v1246, %v1223
        %v1248 = vsel %vm959, %v1247, %v1227
        %v1249 = vsel %vm961, %v1248, %v1231
        %v1250 = vsel %vm963, %v1249, %v1235
        %v1251 = vmul.f32 %v1243, %v1042
        %v1252 = vmul.f32 %v1250, %v1044
        %v1255 = vcombine.low %v1251, %v1252
        %1257 = vst [vmem:[%s296] sm:$0xff] %v1255
        %s1258 = sand.u32 %s184, 1
        %s1259 = scalar_lea.sflag [#allocation4], %s1258
        %s1260 = sand.u32 %s184, 1
        %s1261 = smul.addr %s1260, 8
        %s1262 = scalar_lea.vmem [#allocation5], %s1261
        // Predicated region
        $region53: #{tpu_custom_call.1} parent=47 // pred_check
          %p1263 = pneg %p194
        $region54: #{tpu_custom_call.1} parent=47 // pred_check_branch
          %1265 = sbr.rel (%p1263) target = $region56
        $region55: #{tpu_custom_call.1} parent=47 // pred_region
          %s1267 = ssub.s32 128, 128
          %1268 = vsyncadd %s1259, %s1267
          %s1269 = smul.addr %s24, 2
          %s1270 = smul.addr %s1269, 64
          %s1271 = scalar_lea.hbm %s7, %s1270
          %s1273 = sshll.u32 %s1262, 4
          %s1274 = int_to_ptr.vmem [resolvable:$true] %s1273
          %1276 = dma.vmem_to_hbm [thread:$0]  %s1274, 128, %s1271, %s1259
        $region56: #{tpu_custom_call.1} parent=47 // pred_fallthru
          _
      $region48: #{tpu_custom_call.1} parent=5 // pred_fallthru
        _
      %p1277 = scmp.le.s32.totalorder 2, %s19
      // Predicated region
      $region57: #{tpu_custom_call.1} parent=5 // pred_check
        %p1278 = pneg %p1277
      $region58: #{tpu_custom_call.1} parent=5 // pred_check_branch
        %1280 = sbr.rel (%p1278) target = $region60
      $region59: #{tpu_custom_call.1} parent=5 // pred_region
        %s1281 = ssub.s32 %s19, 2
        // Predicated region
        $region61: #{tpu_custom_call.1} parent=59 // pred_check
          %p1282 = pneg %p200
        $region62: #{tpu_custom_call.1} parent=59 // pred_check_branch
          %1284 = sbr.rel (%p1282) target = $region64
        $region63: #{tpu_custom_call.1} parent=59 // pred_region
          %s1285 = sand.u32 %s185, 1
          %s1286 = scalar_lea.sflag [#allocation4], %s1285
          %s1287 = sand.u32 %s185, 1
          %s1288 = smul.addr %s1287, 8
          %s1289 = scalar_lea.vmem [#allocation5], %s1288
          %1290 = dma.done %s1286, 128
        $region64: #{tpu_custom_call.1} parent=59 // pred_fallthru
          _
      $region60: #{tpu_custom_call.1} parent=5 // pred_fallthru
        _
    $region6: #{tpu_custom_call.1} parent=1 // loop_footer
      %s23 = sadd.s32 1, %s19
    $region7: #{tpu_custom_call.1} parent=1 // loop_footer_branch
      %18 = sbr.rel target = $region3
    $region8: #{tpu_custom_call.1} parent=1 // loop_exit
      _
    %1291 = vsyncpa [#allocation3], 1
    %s1292 = scalar_lea.sflag [#allocation3], 1
    %1293 = vsyncpa %s1292, 1
    %1294 = vsyncpa [#allocation4], 1
    %s1295 = scalar_lea.sflag [#allocation4], 1
    %1296 = vsyncpa %s1295, 1

// kernel: tpu_custom_call.1
$region0: #{tpu_custom_call.1}
  #allocation0 [shape = 'u32[]', space=smem, size = 0x4, offset = 0x4, fixed_abs, tag = 'smem constant byte address 0x4 - core index']
  #allocation1 [shape = 'u32[144,128]{1,0:T(1,128)}', space=vmem, size = 0x12000, scoped, tag = 'internal scratch']
  %s0 = inlined_call_operand.hbm [shape: f32[2,4,16,16], index: 0, kind: input, shape index: {}]
  %s1 = inlined_call_operand.vmem [shape: bf16[4,12], index: 1, kind: input, shape index: {}]
  %s2 = inlined_call_operand.vmem [shape: f32[4,1], index: 2, kind: input, shape index: {}]
  %s3 = inlined_call_operand.vmem [shape: bf16[4,12], index: 3, kind: input, shape index: {}]
  %s4 = inlined_call_operand.vmem [shape: f32[4,1], index: 4, kind: input, shape index: {}]
  %s5 = inlined_call_operand.vmem [shape: bf16[4,4], index: 5, kind: input, shape index: {}]
  %s6 = inlined_call_operand.vmem [shape: f32[4,1], index: 6, kind: input, shape index: {}]
  %s7 = inlined_call_operand.hbm [shape: f32[2,4,256], index: 7, kind: output, shape index: {}]
  %s8 = sld [smem:[#allocation0]]
  $region65: #{tpu_custom_call.1} parent=0
    _
  %s10 = ssub.s32 1, %s8
  %s11 = scalar_select 0, %s10, %s8
  $region1: #{tpu_custom_call.1} parent=0
    #allocation2 [shape = 'u8[65536]{0}', space=vmem, size = 0x10000, scoped, tag = 'input window, operand 0']
    #allocation3 [shape = 's32[2]{0}', space=sflag, size = 0x8, scoped, tag = 'scoped memory for tpu_custom_call.1']
    #allocation4 [shape = 's32[2]{0}', space=sflag, size = 0x8, scoped, tag = 'scoped memory for tpu_custom_call.1']
    #allocation5 [shape = 'u8[8192]{0}', space=vmem, size = 0x2000, scoped, tag = 'output window, operand 0']
    %12 = vsyncpa [#allocation3], 0
    %s13 = scalar_lea.sflag [#allocation3], 1
    %14 = vsyncpa %s13, 0
    %15 = vsyncpa [#allocation4], 0
    %s16 = scalar_lea.sflag [#allocation4], 1
    %17 = vsyncpa %s16, 0
    loop: start=0, step=1, limit=4
    $region2: #{tpu_custom_call.1} parent=1 // loop_pre_header
      _
    $region3: #{tpu_custom_call.1} parent=1 // loop_header
      %s19 = sphi 0, %s23
      %p20 = scmp.ge.s32.totalorder %s19, 4
      %s29 = sphi 0, %s31
      %s32 = sphi 0, %s29
      %s33 = sphi 0, %s32
      %s49 = sphi 0, %s33
      %s53 = sphi 0, %s53
      %s55 = sphi 0, %s53
      %s56 = sphi 0, %s55
      %s70 = sphi 0, %s56
      %s74 = sphi 0, %s74
      %s76 = sphi 0, %s74
      %s77 = sphi 0, %s76
      %s91 = sphi 0, %s77
      %s95 = sphi 0, %s95
      %s97 = sphi 0, %s95
      %s98 = sphi 0, %s97
      %s112 = sphi 0, %s98
      %s116 = sphi 0, %s116
      %s118 = sphi 0, %s116
      %s119 = sphi 0, %s118
      %s133 = sphi 0, %s119
      %s137 = sphi 0, %s137
      %s139 = sphi 0, %s137
      %s140 = sphi 0, %s139
      %s154 = sphi 0, %s140
      %s158 = sphi 0, %s158
      %s160 = sphi 0, %s158
      %s161 = sphi 0, %s160
      %s175 = sphi 0, %s161
      %s181 = sphi 0, %s183
      %s184 = sphi 0, %s181
      %s185 = sphi 0, %s184
      %s201 = sphi 0, %s185
    $region4: #{tpu_custom_call.1} parent=1 // loop_header_branch
      %22 = sbr.rel (%p20) target = $region8
    $region5: #{tpu_custom_call.1} parent=1 // loop_body
      %s24 = ssub.s32 %s19, 1
      %s25 = ssub.s32 %s19, 2
      %s26 = sadd.s32 %s19, 1
      %s27 = ssub.s32 %s19, %s26
      %p28 = scmp.eq.s32.totalorder %s27, 0
      %s30 = sadd.s32 %s29, 1
      %s31 = scalar_select %p28, %s29, %s30
      %p34 = pneg %p28
      %p35 = scmp.eq.s32.totalorder %s19, 1
      %p36 = por %p34, %p35
      %p37 = scmp.ne.s32.totalorder %s29, %s32
      %p38 = scmp.eq.s32.totalorder %s19, 0
      %p39 = por %p37, %p38
      %p40 = scmp.ne.s32.totalorder %s29, %s32
      %p41 = scmp.eq.s32.totalorder %s24, 1
      %p42 = por %p40, %p41
      %p43 = scmp.ne.s32.totalorder %s32, %s33
      %p44 = scmp.eq.s32.totalorder %s24, 0
      %p45 = por %p43, %p44
      %p46 = scmp.ne.s32.totalorder %s32, %s33
      %p47 = scmp.eq.s32.totalorder %s25, 1
      %p48 = por %p46, %p47
      %p50 = scmp.ne.s32.totalorder %s33, %s49
      %p51 = scmp.eq.s32.totalorder %s25, 0
      %p52 = por %p50, %p51
      %s54 = sadd.s32 %s53, 1
      %p57 = scmp.eq.s32.totalorder %s19, 1
      %p58 = scmp.ne.s32.totalorder %s53, %s55
      %p59 = scmp.eq.s32.totalorder %s19, 0
      %p60 = por %p58, %p59
      %p61 = scmp.ne.s32.totalorder %s53, %s55
      %p62 = scmp.eq.s32.totalorder %s24, 1
      %p63 = por %p61, %p62
      %p64 = scmp.ne.s32.totalorder %s55, %s56
      %p65 = scmp.eq.s32.totalorder %s24, 0
      %p66 = por %p64, %p65
      %p67 = scmp.ne.s32.totalorder %s55, %s56
      %p68 = scmp.eq.s32.totalorder %s25, 1
      %p69 = por %p67, %p68
      %p71 = scmp.ne.s32.totalorder %s56, %s70
      %p72 = scmp.eq.s32.totalorder %s25, 0
      %p73 = por %p71, %p72
      %s75 = sadd.s32 %s74, 1
      %p78 = scmp.eq.s32.totalorder %s19, 1
      %p79 = scmp.ne.s32.totalorder %s74, %s76
      %p80 = scmp.eq.s32.totalorder %s19, 0
      %p81 = por %p79, %p80
      %p82 = scmp.ne.s32.totalorder %s74, %s76
      %p83 = scmp.eq.s32.totalorder %s24, 1
      %p84 = por %p82, %p83
      %p85 = scmp.ne.s32.totalorder %s76, %s77
      %p86 = scmp.eq.s32.totalorder %s24, 0
      %p87 = por %p85, %p86
      %p88 = scmp.ne.s32.totalorder %s76, %s77
      %p89 = scmp.eq.s32.totalorder %s25, 1
      %p90 = por %p88, %p89
      %p92 = scmp.ne.s32.totalorder %s77, %s91
      %p93 = scmp.eq.s32.totalorder %s25, 0
      %p94 = por %p92, %p93
      %s96 = sadd.s32 %s95, 1
      %p99 = scmp.eq.s32.totalorder %s19, 1
      %p100 = scmp.ne.s32.totalorder %s95, %s97
      %p101 = scmp.eq.s32.totalorder %s19, 0
      %p102 = por %p100, %p101
      %p103 = scmp.ne.s32.totalorder %s95, %s97
      %p104 = scmp.eq.s32.totalorder %s24, 1
      %p105 = por %p103, %p104
      %p106 = scmp.ne.s32.totalorder %s97, %s98
      %p107 = scmp.eq.s32.totalorder %s24, 0
      %p108 = por %p106, %p107
      %p109 = scmp.ne.s32.totalorder %s97, %s98
      %p110 = scmp.eq.s32.totalorder %s25, 1
      %p111 = por %p109, %p110
      %p113 = scmp.ne.s32.totalorder %s98, %s112
      %p114 = scmp.eq.s32.totalorder %s25, 0
      %p115 = por %p113, %p114
      %s117 = sadd.s32 %s116, 1
      %p120 = scmp.eq.s32.totalorder %s19, 1
      %p121 = scmp.ne.s32.totalorder %s116, %s118
      %p122 = scmp.eq.s32.totalorder %s19, 0
      %p123 = por %p121, %p122
      %p124 = scmp.ne.s32.totalorder %s116, %s118
      %p125 = scmp.eq.s32.totalorder %s24, 1
      %p126 = por %p124, %p125
      %p127 = scmp.ne.s32.totalorder %s118, %s119
      %p128 = scmp.eq.s32.totalorder %s24, 0
      %p129 = por %p127, %p128
      %p130 = scmp.ne.s32.totalorder %s118, %s119
      %p131 = scmp.eq.s32.totalorder %s25, 1
      %p132 = por %p130, %p131
      %p134 = scmp.ne.s32.totalorder %s119, %s133
      %p135 = scmp.eq.s32.totalorder %s25, 0
      %p136 = por %p134, %p135
      %s138 = sadd.s32 %s137, 1
      %p141 = scmp.eq.s32.totalorder %s19, 1
      %p142 = scmp.ne.s32.totalorder %s137, %s139
      %p143 = scmp.eq.s32.totalorder %s19, 0
      %p144 = por %p142, %p143
      %p145 = scmp.ne.s32.totalorder %s137, %s139
      %p146 = scmp.eq.s32.totalorder %s24, 1
      %p147 = por %p145, %p146
      %p148 = scmp.ne.s32.totalorder %s139, %s140
      %p149 = scmp.eq.s32.totalorder %s24, 0
      %p150 = por %p148, %p149
      %p151 = scmp.ne.s32.totalorder %s139, %s140
      %p152 = scmp.eq.s32.totalorder %s25, 1
      %p153 = por %p151, %p152
      %p155 = scmp.ne.s32.totalorder %s140, %s154
      %p156 = scmp.eq.s32.totalorder %s25, 0
      %p157 = por %p155, %p156
      %s159 = sadd.s32 %s158, 1
      %p162 = scmp.eq.s32.totalorder %s19, 1
      %p163 = scmp.ne.s32.totalorder %s158, %s160
      %p164 = scmp.eq.s32.totalorder %s19, 0
      %p165 = por %p163, %p164
      %p166 = scmp.ne.s32.totalorder %s158, %s160
      %p167 = scmp.eq.s32.totalorder %s24, 1
      %p168 = por %p166, %p167
      %p169 = scmp.ne.s32.totalorder %s160, %s161
      %p170 = scmp.eq.s32.totalorder %s24, 0
      %p171 = por %p169, %p170
      %p172 = scmp.ne.s32.totalorder %s160, %s161
      %p173 = scmp.eq.s32.totalorder %s25, 1
      %p174 = por %p172, %p173
      %p176 = scmp.ne.s32.totalorder %s161, %s175
      %p177 = scmp.eq.s32.totalorder %s25, 0
      %p178 = por %p176, %p177
      %s179 = ssub.s32 %s19, %s26
      %p180 = scmp.eq.s32.totalorder %s179, 0
      %s182 = sadd.s32 %s181, 1
      %s183 = scalar_select %p180, %s181, %s182
      %p186 = pneg %p180
      %p187 = scmp.eq.s32.totalorder %s19, 1
      %p188 = por %p186, %p187
      %p189 = scmp.ne.s32.totalorder %s181, %s184
      %p190 = scmp.eq.s32.totalorder %s19, 0
      %p191 = por %p189, %p190
      %p192 = scmp.ne.s32.totalorder %s181, %s184
      %p193 = scmp.eq.s32.totalorder %s24, 1
      %p194 = por %p192, %p193
      %p195 = scmp.ne.s32.totalorder %s184, %s185
      %p196 = scmp.eq.s32.totalorder %s24, 0
      %p197 = por %p195, %p196
      %p198 = scmp.ne.s32.totalorder %s184, %s185
      %p199 = scmp.eq.s32.totalorder %s25, 1
      %p200 = por %p198, %p199
      %p202 = scmp.ne.s32.totalorder %s185, %s201
      %p203 = scmp.eq.s32.totalorder %s25, 0
      %p204 = por %p202, %p203
      %p205 = scmp.le.s32.totalorder 1, %s19
      %p206 = scmp.lt.s32.totalorder %s19, 3
      %p207 = pnand %p205, %p206
      %p208 = pneg %p207
      // Predicated region
      $region9: #{tpu_custom_call.1} parent=5 // pred_check
        _
      $region10: #{tpu_custom_call.1} parent=5 // pred_check_branch
        %210 = sbr.rel (%p207) target = $region12
      $region11: #{tpu_custom_call.1} parent=5 // pred_region
        %s211 = ssub.s32 %s19, 1
        // Predicated region
        $region13: #{tpu_custom_call.1} parent=11 // pred_check
          %p212 = pneg %p66
        $region14: #{tpu_custom_call.1} parent=11 // pred_check_branch
          %214 = sbr.rel (%p212) target = $region16
        $region15: #{tpu_custom_call.1} parent=11 // pred_region
          _
        $region16: #{tpu_custom_call.1} parent=11 // pred_fallthru
          _
        // Predicated region
        $region17: #{tpu_custom_call.1} parent=11 // pred_check
          %p215 = pneg %p87
        $region18: #{tpu_custom_call.1} parent=11 // pred_check_branch
          %217 = sbr.rel (%p215) target = $region20
        $region19: #{tpu_custom_call.1} parent=11 // pred_region
          _
        $region20: #{tpu_custom_call.1} parent=11 // pred_fallthru
          _
        // Predicated region
        $region21: #{tpu_custom_call.1} parent=11 // pred_check
          %p218 = pneg %p108
        $region22: #{tpu_custom_call.1} parent=11 // pred_check_branch
          %220 = sbr.rel (%p218) target = $region24
        $region23: #{tpu_custom_call.1} parent=11 // pred_region
          _
        $region24: #{tpu_custom_call.1} parent=11 // pred_fallthru
          _
        // Predicated region
        $region25: #{tpu_custom_call.1} parent=11 // pred_check
          %p221 = pneg %p129
        $region26: #{tpu_custom_call.1} parent=11 // pred_check_branch
          %223 = sbr.rel (%p221) target = $region28
        $region27: #{tpu_custom_call.1} parent=11 // pred_region
          _
        $region28: #{tpu_custom_call.1} parent=11 // pred_fallthru
          _
        // Predicated region
        $region29: #{tpu_custom_call.1} parent=11 // pred_check
          %p224 = pneg %p150
        $region30: #{tpu_custom_call.1} parent=11 // pred_check_branch
          %226 = sbr.rel (%p224) target = $region32
        $region31: #{tpu_custom_call.1} parent=11 // pred_region
          _
        $region32: #{tpu_custom_call.1} parent=11 // pred_fallthru
          _
        // Predicated region
        $region33: #{tpu_custom_call.1} parent=11 // pred_check
          %p227 = pneg %p171
        $region34: #{tpu_custom_call.1} parent=11 // pred_check_branch
          %229 = sbr.rel (%p227) target = $region36
        $region35: #{tpu_custom_call.1} parent=11 // pred_region
          _
        $region36: #{tpu_custom_call.1} parent=11 // pred_fallthru
          _
      $region12: #{tpu_custom_call.1} parent=5 // pred_fallthru
        _
      %p230 = scmp.lt.s32.totalorder %s19, 2
      // Predicated region
      $region37: #{tpu_custom_call.1} parent=5 // pred_check
        %p231 = pneg %p230
      $region38: #{tpu_custom_call.1} parent=5 // pred_check_branch
        %233 = sbr.rel (%p231) target = $region40
      $region39: #{tpu_custom_call.1} parent=5 // pred_region
        // Predicated region
        $region41: #{tpu_custom_call.1} parent=39 // pred_check
          %p234 = pneg %p39
        $region42: #{tpu_custom_call.1} parent=39 // pred_check_branch
          %236 = sbr.rel (%p234) target = $region44
        $region43: #{tpu_custom_call.1} parent=39 // pred_region
          %s237 = sand.u32 %s29, 1
          %s238 = scalar_lea.sflag [#allocation3], %s237
          %s239 = sand.u32 %s29, 1
          %s240 = smul.addr %s239, 64
          %s241 = scalar_lea.vmem [#allocation2], %s240
          %s243 = ssub.s32 1024, 1024
          %244 = vsyncadd %s238, %s243
          %s245 = smul.addr %s19, 8
          %s246 = smul.addr %s245, 128
          %s247 = scalar_lea.hbm %s0, %s246
          %s248 = sshll.u32 %s241, 4
          %s249 = int_to_ptr.vmem [resolvable:$true] %s248
          %254 = dma.hbm_to_vmem [thread:$0]  %s247, 1024, %s249, %s238, 128, 128, 8
        $region44: #{tpu_custom_call.1} parent=39 // pred_fallthru
          _
      $region40: #{tpu_custom_call.1} parent=5 // pred_fallthru
        _
      %p255 = scmp.le.s32.totalorder 1, %s19
      %p256 = scmp.lt.s32.totalorder %s19, 3
      %p257 = pnand %p255, %p256
      %p258 = pneg %p257
      // Predicated region
      $region45: #{tpu_custom_call.1} parent=5 // pred_check
        _
      $region46: #{tpu_custom_call.1} parent=5 // pred_check_branch
        %260 = sbr.rel (%p257) target = $region48
      $region47: #{tpu_custom_call.1} parent=5 // pred_region
        %s261 = ssub.s32 %s19, 1
        %s262 = sand.u32 %s32, 1
        %s263 = scalar_lea.sflag [#allocation3], %s262
        %s264 = sand.u32 %s32, 1
        %s265 = smul.addr %s264, 64
        %s266 = scalar_lea.vmem [#allocation2], %s265
        // Predicated region
        $region49: #{tpu_custom_call.1} parent=47 // pred_check
          %p267 = pneg %p45
        $region50: #{tpu_custom_call.1} parent=47 // pred_check_branch
          %269 = sbr.rel (%p267) target = $region52
        $region51: #{tpu_custom_call.1} parent=47 // pred_region
          %270 = dma.done %s263, 1024
        $region52: #{tpu_custom_call.1} parent=47 // pred_fallthru
          _
        %s271 = sand.u32 %s32, 1
        %s272 = scalar_lea.sflag [#allocation3], %s271
        %s273 = sand.u32 %s32, 1
        %s274 = smul.addr %s273, 64
        %s275 = scalar_lea.vmem [#allocation2], %s274
        %p276 = pneg %p45
        %p277 = pneg %p42
        %p278 = pneg %p66
        %p279 = pneg %p63
        %p280 = pneg %p87
        %p281 = pneg %p84
        %p282 = pneg %p108
        %p283 = pneg %p105
        %p284 = pneg %p129
        %p285 = pneg %p126
        %p286 = pneg %p150
        %p287 = pneg %p147
        %p288 = pneg %p171
        %p289 = pneg %p168
        %p290 = pneg %p197
        %p291 = pneg %p194
        %s292 = sand.u32 %s184, 1
        %s293 = scalar_lea.sflag [#allocation4], %s292
        %s294 = sand.u32 %s184, 1
        %s295 = smul.addr %s294, 8
        %s296 = scalar_lea.vmem [#allocation5], %s295
        %v298 = vld [vmem:[%s266] sm:$0xff]
        %v299 = vld [vmem:[%s266 + $0x8] sm:$0xff]
        %v300 = vld [vmem:[%s266 + $0x10] sm:$0xff]
        %v301 = vld [vmem:[%s266 + $0x18] sm:$0xff]
        %v302 = vld [vmem:[%s266 + $0x20] sm:$0xff]
        %v303 = vld [vmem:[%s266 + $0x28] sm:$0xff]
        %v304 = vld [vmem:[%s266 + $0x30] sm:$0xff]
        %v305 = vld [vmem:[%s266 + $0x38] sm:$0xff]
        %vm306 = vcmask 130048
        %v307 = vsel %vm306, %v298, 0.0
        %308 = vadd.xlane.f32.xlu0 %v307
        %v309 = vpop.xlane.xlu0 %308
        %v310 = vsel %vm306, %v299, 0.0
        %311 = vadd.xlane.f32.xlu0 %v310
        %v312 = vpop.xlane.xlu0 %311
        %v313 = vsel %vm306, %v300, 0.0
        %314 = vadd.xlane.f32.xlu0 %v313
        %v315 = vpop.xlane.xlu0 %314
        %v316 = vsel %vm306, %v301, 0.0
        %317 = vadd.xlane.f32.xlu0 %v316
        %v318 = vpop.xlane.xlu0 %317
        %v319 = vsel %vm306, %v302, 0.0
        %320 = vadd.xlane.f32.xlu0 %v319
        %v321 = vpop.xlane.xlu0 %320
        %v322 = vsel %vm306, %v303, 0.0
        %323 = vadd.xlane.f32.xlu0 %v322
        %v324 = vpop.xlane.xlu0 %323
        %v325 = vsel %vm306, %v304, 0.0
        %326 = vadd.xlane.f32.xlu0 %v325
        %v327 = vpop.xlane.xlu0 %326
        %v328 = vsel %vm306, %v305, 0.0
        %329 = vadd.xlane.f32.xlu0 %v328
        %v330 = vpop.xlane.xlu0 %329
        %v331 = vmul.f32 %v309, 0.0625
        %v332 = vmul.f32 %v312, 0.0625
        %v333 = vmul.f32 %v315, 0.0625
        %v334 = vmul.f32 %v318, 0.0625
        %v335 = vmul.f32 %v321, 0.0625
        %v336 = vmul.f32 %v324, 0.0625
        %v337 = vmul.f32 %v327, 0.0625
        %v338 = vmul.f32 %v330, 0.0625
        %v339 = vadd.f32 %v307, %v310
        %v340 = vrot.slane %v339, 4
        %v341 = vadd.f32 %v339, %v340
        %v342 = vrot.slane %v341, 2
        %v343 = vadd.f32 %v341, %v342
        %v344 = vrot.slane %v343, 1
        %v345 = vadd.f32 %v343, %v344
        %v346 = vadd.f32 %v313, %v316
        %v347 = vrot.slane %v346, 4
        %v348 = vadd.f32 %v346, %v347
        %v349 = vrot.slane %v348, 2
        %v350 = vadd.f32 %v348, %v349
        %v351 = vrot.slane %v350, 1
        %v352 = vadd.f32 %v350, %v351
        %v353 = vadd.f32 %v319, %v322
        %v354 = vrot.slane %v353, 4
        %v355 = vadd.f32 %v353, %v354
        %v356 = vrot.slane %v355, 2
        %v357 = vadd.f32 %v355, %v356
        %v358 = vrot.slane %v357, 1
        %v359 = vadd.f32 %v357, %v358
        %v360 = vadd.f32 %v325, %v328
        %v361 = vrot.slane %v360, 4
        %v362 = vadd.f32 %v360, %v361
        %v363 = vrot.slane %v362, 2
        %v364 = vadd.f32 %v362, %v363
        %v365 = vrot.slane %v364, 1
        %v366 = vadd.f32 %v364, %v365
        %v367 = vmul.f32 %v345, 0.0625
        %v368 = vmul.f32 %v352, 0.0625
        %v369 = vmul.f32 %v359, 0.0625
        %v370 = vmul.f32 %v366, 0.0625
        %v379 = vlaneseq
        %v380 = vand.u32 %v379, 127
        %v381 = vadd.s32 %v380, 4294967295
        %v382 = vlaneseq
        %v383 = vshrl.u32 %v382, 7
        %v384 = vsub.s32 %v381, %v383
        %v385 = vrot.slane %v331, %v384
        %v386 = vadd.s32 %v380, 4294967287
        %v387 = vlaneseq
        %v388 = vshrl.u32 %v387, 7
        %v389 = vsub.s32 %v386, %v388
        %v390 = vrot.slane %v332, %v389
        %vm391 = vcmask 138312
        %v392 = vsel %vm391, %v390, %v385
        %v393 = vlaneseq
        %v394 = vshrl.u32 %v393, 7
        %v395 = vsub.s32 %v381, %v394
        %v396 = vrot.slane %v333, %v395
        %v397 = vlaneseq
        %v398 = vshrl.u32 %v397, 7
        %v399 = vsub.s32 %v386, %v398
        %v400 = vrot.slane %v334, %v399
        %v401 = vsel %vm391, %v400, %v396
        %v402 = vlaneseq
        %v403 = vshrl.u32 %v402, 7
        %v404 = vsub.s32 %v381, %v403
        %v405 = vrot.slane %v335, %v404
        %v406 = vlaneseq
        %v407 = vshrl.u32 %v406, 7
        %v408 = vsub.s32 %v386, %v407
        %v409 = vrot.slane %v336, %v408
        %v410 = vsel %vm391, %v409, %v405
        %v411 = vlaneseq
        %v412 = vshrl.u32 %v411, 7
        %v413 = vsub.s32 %v381, %v412
        %v414 = vrot.slane %v337, %v413
        %v415 = vlaneseq
        %v416 = vshrl.u32 %v415, 7
        %v417 = vsub.s32 %v386, %v416
        %v418 = vrot.slane %v338, %v417
        %v419 = vsel %vm391, %v418, %v414
        %vm420 = vcmask 1041409
        %v421 = vsel %vm420, %v401, %v392
        %vm422 = vcmask 1042434
        %v423 = vsel %vm422, %v410, %v421
        %vm424 = vcmask 1043459
        %v425 = vsel %vm424, %v419, %v423
        %vm427 = vcmask 7168
        %v428 = vsel %vm427, 0.0, %v425
        %v429 = vadd.s32 %v380, 1
        %v430 = vlaneseq
        %v431 = vshrl.u32 %v430, 7
        %v432 = vsub.s32 %v429, %v431
        %v433 = vrot.slane %v331, %v432
        %v434 = vadd.s32 %v380, 4294967289
        %v435 = vlaneseq
        %v436 = vshrl.u32 %v435, 7
        %v437 = vsub.s32 %v434, %v436
        %v438 = vrot.slane %v332, %v437
        %vm439 = vcmask 121912
        %v440 = vsel %vm439, %v438, %v433
        %v441 = vlaneseq
        %v442 = vshrl.u32 %v441, 7
        %v443 = vsub.s32 %v429, %v442
        %v444 = vrot.slane %v333, %v443
        %v445 = vlaneseq
        %v446 = vshrl.u32 %v445, 7
        %v447 = vsub.s32 %v434, %v446
        %v448 = vrot.slane %v334, %v447
        %v449 = vsel %vm439, %v448, %v444
        %v450 = vlaneseq
        %v451 = vshrl.u32 %v450, 7
        %v452 = vsub.s32 %v429, %v451
        %v453 = vrot.slane %v335, %v452
        %v454 = vlaneseq
        %v455 = vshrl.u32 %v454, 7
        %v456 = vsub.s32 %v434, %v455
        %v457 = vrot.slane %v336, %v456
        %v458 = vsel %vm439, %v457, %v453
        %v459 = vlaneseq
        %v460 = vshrl.u32 %v459, 7
        %v461 = vsub.s32 %v429, %v460
        %v462 = vrot.slane %v337, %v461
        %v463 = vlaneseq
        %v464 = vshrl.u32 %v463, 7
        %v465 = vsub.s32 %v434, %v464
        %v466 = vrot.slane %v338, %v465
        %v467 = vsel %vm439, %v466, %v462
        %v468 = vsel %vm422, %v449, %v440
        %v469 = vsel %vm424, %v458, %v468
        %vm470 = vcmask 1044484
        %v471 = vsel %vm470, %v467, %v469
        %vm473 = vcmask 121856
        %v474 = vsel %vm473, %v471, 0.0
        %v475 = vlaneseq
        %v476 = vshrl.u32 %v475, 7
        %v477 = vsub.s32 %v380, %v476
        %v478 = vrot.slane %v331, %v477
        %v479 = vadd.s32 %v380, 4294967288
        %v480 = vlaneseq
        %v481 = vshrl.u32 %v480, 7
        %v482 = vsub.s32 %v479, %v481
        %v483 = vrot.slane %v332, %v482
        %vm484 = vcmask 130112
        %v485 = vsel %vm484, %v483, %v478
        %v486 = vlaneseq
        %v487 = vshrl.u32 %v486, 7
        %v488 = vsub.s32 %v380, %v487
        %v489 = vrot.slane %v333, %v488
        %v490 = vlaneseq
        %v491 = vshrl.u32 %v490, 7
        %v492 = vsub.s32 %v479, %v491
        %v493 = vrot.slane %v334, %v492
        %v494 = vsel %vm484, %v493, %v489
        %v495 = vlaneseq
        %v496 = vshrl.u32 %v495, 7
        %v497 = vsub.s32 %v380, %v496
        %v498 = vrot.slane %v335, %v497
        %v499 = vlaneseq
        %v500 = vshrl.u32 %v499, 7
        %v501 = vsub.s32 %v479, %v500
        %v502 = vrot.slane %v336, %v501
        %v503 = vsel %vm484, %v502, %v498
        %v504 = vlaneseq
        %v505 = vshrl.u32 %v504, 7
        %v506 = vsub.s32 %v380, %v505
        %v507 = vrot.slane %v337, %v506
        %v508 = vlaneseq
        %v509 = vshrl.u32 %v508, 7
        %v510 = vsub.s32 %v479, %v509
        %v511 = vrot.slane %v338, %v510
        %v512 = vsel %vm484, %v511, %v507
        %vm513 = vcmask 1045509
        %v514 = vsel %vm513, %v494, %v485
        %vm515 = vcmask 1046534
        %v516 = vsel %vm515, %v503, %v514
        %vm517 = vcmask 1047559
        %v518 = vsel %vm517, %v512, %v516
        %v521 = vrot.slane %v474, 1
        %vm523 = vcmask 1043456
        %v524 = vsel %vm523, %v428, %v518
        %v525 = vpack.c.bf16 %v521, %v524
        %v526 = vld [vmem:[%s1] sm:$0x3]
        %v527 = vld [vmem:[%s2] sm:$0xf]
        %529 = vset.pattern.permute.xlu0 0
        %530 = vperm.xlu0 %529, %v527
        %v531 = vpop.permute.xlu0 %530
        %vm533 = vcmask 97280
        %v535 = vsel %vm533, %v526, 0
        %vm537 = vcmask 1045504
        %v539 = vsel %vm537, %v525, 0
        %541 = vmatprep.subr.bf16.mxu0 0
        %542 = vmatpush1.bf16.msra.mxu0 %v539
        %543 = vmatprep.subr.bf16.mxu0 0
        %544 = vmatpush1.bf16.msra.mxu0 0
        %545 = vmatprep.subr.bf16.mxu0 0
        %546 = vmatpush1.bf16.msra.mxu0 0
        %547 = vmatprep.subr.bf16.mxu0 0
        %548 = vmatpush1.bf16.msra.mxu0 0
        %549 = vmatprep.subr.bf16.mxu0 0
        %550 = vmatpush1.bf16.msra.mxu0 0
        %551 = vmatprep.subr.bf16.mxu0 0
        %552 = vmatpush1.bf16.msra.mxu0 0
        %553 = vmatprep.subr.bf16.mxu0 0
        %554 = vmatpush1.bf16.msra.mxu0 0
        %555 = vmatprep.subr.bf16.mxu0 0
        %556 = vmatpush1.bf16.msra.mxu0 0
        %557 = vmatprep.subr.bf16.mxu0 0
        %558 = vmatpush1.bf16.msra.mxu0 0
        %559 = vmatprep.subr.bf16.mxu0 0
        %560 = vmatpush1.bf16.msra.mxu0 0
        %561 = vmatprep.subr.bf16.mxu0 0
        %562 = vmatpush1.bf16.msra.mxu0 0
        %563 = vmatprep.subr.bf16.mxu0 0
        %564 = vmatpush1.bf16.msra.mxu0 0
        %565 = vmatprep.subr.bf16.mxu0 0
        %566 = vmatpush1.bf16.msra.mxu0 0
        %567 = vmatprep.subr.bf16.mxu0 0
        %568 = vmatpush1.bf16.msra.mxu0 0
        %569 = vmatprep.subr.bf16.mxu0 0
        %570 = vmatpush1.bf16.msra.mxu0 0
        %571 = vmatprep.subr.bf16.mxu0 0
        %572 = vmatpush1.bf16.msra.mxu0 0
        %573 = vmatprep.mubr.bf16.mxu0 0
        %574 = vmatmul.mubr.bf16.gmra.mrb[0].mxu0 %v535
        %v575 = vpop.f32.mrb[0].mxu0
        %v576 = vadd.f32 %v531, %v575
        %v577 = vpop.f32.mrb[0].mxu0
        %v578 = vpop.f32.mrb[0].mxu0
        %v579 = vpop.f32.mrb[0].mxu0
        %580 = vdwg.mxu0
        %v585 = vsel %vm420, %v368, %v367
        %v586 = vsel %vm422, %v369, %v585
        %v587 = vsel %vm424, %v370, %v586
        %588 = vrot.lane.b32.xlu0 %v587, 1
        %v589 = vpop.permute.xlu0 %588
        %v591 = vsel %vm427, 0.0, %v589
        %592 = vrot.lane.b32.xlu0 %v587, 127
        %v593 = vpop.permute.xlu0 %592
        %v595 = vsel %vm473, %v593, 0.0
        %v596 = vsel %vm513, %v368, %v367
        %v597 = vsel %vm515, %v369, %v596
        %v598 = vsel %vm517, %v370, %v597
        %v600 = vsel %vm523, %v591, %v598
        %v601 = vpack.c.bf16 %v595, %v600
        %v602 = vld [vmem:[%s3] sm:$0x3]
        %v603 = vld [vmem:[%s4] sm:$0xf]
        %605 = vset.pattern.permute.xlu0 0
        %606 = vperm.xlu0 %605, %v603
        %v607 = vpop.permute.xlu0 %606
        %v610 = vsel %vm533, %v602, 0
        %v613 = vsel %vm537, %v601, 0
        %615 = vmatprep.subr.bf16.mxu0 0
        %616 = vmatpush1.bf16.msra.mxu0 %v613
        %617 = vmatprep.subr.bf16.mxu0 0
        %618 = vmatpush1.bf16.msra.mxu0 0
        %619 = vmatprep.subr.bf16.mxu0 0
        %620 = vmatpush1.bf16.msra.mxu0 0
        %621 = vmatprep.subr.bf16.mxu0 0
        %622 = vmatpush1.bf16.msra.mxu0 0
        %623 = vmatprep.subr.bf16.mxu0 0
        %624 = vmatpush1.bf16.msra.mxu0 0
        %625 = vmatprep.subr.bf16.mxu0 0
        %626 = vmatpush1.bf16.msra.mxu0 0
        %627 = vmatprep.subr.bf16.mxu0 0
        %628 = vmatpush1.bf16.msra.mxu0 0
        %629 = vmatprep.subr.bf16.mxu0 0
        %630 = vmatpush1.bf16.msra.mxu0 0
        %631 = vmatprep.subr.bf16.mxu0 0
        %632 = vmatpush1.bf16.msra.mxu0 0
        %633 = vmatprep.subr.bf16.mxu0 0
        %634 = vmatpush1.bf16.msra.mxu0 0
        %635 = vmatprep.subr.bf16.mxu0 0
        %636 = vmatpush1.bf16.msra.mxu0 0
        %637 = vmatprep.subr.bf16.mxu0 0
        %638 = vmatpush1.bf16.msra.mxu0 0
        %639 = vmatprep.subr.bf16.mxu0 0
        %640 = vmatpush1.bf16.msra.mxu0 0
        %641 = vmatprep.subr.bf16.mxu0 0
        %642 = vmatpush1.bf16.msra.mxu0 0
        %643 = vmatprep.subr.bf16.mxu0 0
        %644 = vmatpush1.bf16.msra.mxu0 0
        %645 = vmatprep.subr.bf16.mxu0 0
        %646 = vmatpush1.bf16.msra.mxu0 0
        %647 = vmatprep.mubr.bf16.mxu0 0
        %648 = vmatmul.mubr.bf16.gmra.mrb[0].mxu0 %v610
        %v649 = vpop.f32.mrb[0].mxu0
        %v650 = vadd.f32 %v607, %v649
        %v651 = vpop.f32.mrb[0].mxu0
        %v652 = vpop.f32.mrb[0].mxu0
        %v653 = vpop.f32.mrb[0].mxu0
        %654 = vdwg.mxu0
        %v655 = vlaneseq
        %v656 = vshrl.u32 %v655, 7
        %v657 = vsub.s32 0, %v656
        %v658 = vrot.slane %v576, %v657
        %660 = vbcast.lane.b32.xlu0 %v658, 256
        %v661 = vpop.permute.xlu0 %660
        %s663 = sor.u32 256, 8
        %664 = vbcast.lane.b32.xlu0 %v658, %s663
        %v665 = vpop.permute.xlu0 %664
        %v666 = vlaneseq
        %v667 = vshrl.u32 %v666, 7
        %v668 = vsub.s32 1, %v667
        %v669 = vrot.slane %v576, %v668
        %671 = vbcast.lane.b32.xlu0 %v669, 256
        %v672 = vpop.permute.xlu0 %671
        %s674 = sor.u32 256, 8
        %675 = vbcast.lane.b32.xlu0 %v669, %s674
        %v676 = vpop.permute.xlu0 %675
        %v677 = vlaneseq
        %v678 = vshrl.u32 %v677, 7
        %v679 = vsub.s32 2, %v678
        %v680 = vrot.slane %v576, %v679
        %682 = vbcast.lane.b32.xlu0 %v680, 256
        %v683 = vpop.permute.xlu0 %682
        %s685 = sor.u32 256, 8
        %686 = vbcast.lane.b32.xlu0 %v680, %s685
        %v687 = vpop.permute.xlu0 %686
        %v688 = vlaneseq
        %v689 = vshrl.u32 %v688, 7
        %v690 = vsub.s32 3, %v689
        %v691 = vrot.slane %v576, %v690
        %693 = vbcast.lane.b32.xlu0 %v691, 256
        %v694 = vpop.permute.xlu0 %693
        %s696 = sor.u32 256, 8
        %697 = vbcast.lane.b32.xlu0 %v691, %s696
        %v698 = vpop.permute.xlu0 %697
        %v701 = vunpack.c.l.s4 1966171168
        %v702 = vunpack.c.0.s8 %v701
        %v703 = vlaneseq
        %v704 = vshrl.u32 %v703, 7
        %v705 = vsub.s32 %v702, %v704
        %v706 = vrot.slane %v650, %v705
        %v707 = vcombine.high %v706, %v706
        %v709 = vunpack.c.l.s4 1966171168
        %v710 = vunpack.c.0.s8 %v709
        %v711 = vlaneseq
        %v712 = vshrl.u32 %v711, 7
        %v713 = vsub.s32 %v710, %v712
        %v714 = vrot.slane %v706, %v713
        %v716 = vunpack.c.l.s4 1966171168
        %v717 = vunpack.c.0.s8 %v716
        %v718 = vlaneseq
        %v719 = vshrl.u32 %v718, 7
        %v720 = vsub.s32 %v717, %v719
        %v721 = vrot.slane %v707, %v720
        %v722 = vcombine.high %v714, %v714
        %v723 = vcombine.high %v721, %v721
        %v724 = vlaneseq
        %v725 = vshrl.u32 %v724, 7
        %v726 = vsub.s32 0, %v725
        %v727 = vrot.slane %v714, %v726
        %v728 = vlaneseq
        %v729 = vshrl.u32 %v728, 7
        %v730 = vsub.s32 0, %v729
        %v731 = vrot.slane %v721, %v730
        %v732 = vlaneseq
        %v733 = vshrl.u32 %v732, 7
        %v734 = vsub.s32 0, %v733
        %v735 = vrot.slane %v722, %v734
        %v736 = vlaneseq
        %v737 = vshrl.u32 %v736, 7
        %v738 = vsub.s32 0, %v737
        %v739 = vrot.slane %v723, %v738
        %v744 = vadd.f32 %v661, %v727
        %v745 = vadd.f32 %v665, %v727
        %v746 = vadd.f32 %v672, %v731
        %v747 = vadd.f32 %v676, %v731
        %v748 = vadd.f32 %v683, %v735
        %v749 = vadd.f32 %v687, %v735
        %v750 = vadd.f32 %v694, %v739
        %v751 = vadd.f32 %v698, %v739
        %v752 = vmax.f32 %v744, 0.0
        %v753 = vmax.f32 %v745, 0.0
        %v754 = vmax.f32 %v746, 0.0
        %v755 = vmax.f32 %v747, 0.0
        %v756 = vmax.f32 %v748, 0.0
        %v757 = vmax.f32 %v749, 0.0
        %v758 = vmax.f32 %v750, 0.0
        %v759 = vmax.f32 %v751, 0.0
        %v760 = vcombine.low %v752, %v756
        %v761 = vcombine.high %v752, %v756
        %v763 = vunpack.c.l.s4 1983009808
        %v764 = vunpack.c.0.s8 %v763
        %v765 = vlaneseq
        %v766 = vshrl.u32 %v765, 7
        %v767 = vsub.s32 %v764, %v766
        %v768 = vrot.slane %v760, %v767
        %v770 = vunpack.c.l.s4 1983009808
        %v771 = vunpack.c.0.s8 %v770
        %v772 = vlaneseq
        %v773 = vshrl.u32 %v772, 7
        %v774 = vsub.s32 %v771, %v773
        %v775 = vrot.slane %v761, %v774
        %v776 = vcombine.low %v754, %v758
        %v777 = vcombine.high %v754, %v758
        %v779 = vunpack.c.l.s4 1983009808
        %v780 = vunpack.c.0.s8 %v779
        %v781 = vlaneseq
        %v782 = vshrl.u32 %v781, 7
        %v783 = vsub.s32 %v780, %v782
        %v784 = vrot.slane %v776, %v783
        %v786 = vunpack.c.l.s4 1983009808
        %v787 = vunpack.c.0.s8 %v786
        %v788 = vlaneseq
        %v789 = vshrl.u32 %v788, 7
        %v790 = vsub.s32 %v787, %v789
        %v791 = vrot.slane %v777, %v790
        %v792 = vcombine.low %v768, %v784
        %v793 = vcombine.high %v768, %v784
        %v795 = vunpack.c.l.s4 1934713408
        %v796 = vunpack.c.0.s8 %v795
        %v797 = vlaneseq
        %v798 = vshrl.u32 %v797, 7
        %v799 = vsub.s32 %v796, %v798
        %v800 = vrot.slane %v792, %v799
        %v802 = vunpack.c.l.s4 1934713408
        %v803 = vunpack.c.0.s8 %v802
        %v804 = vlaneseq
        %v805 = vshrl.u32 %v804, 7
        %v806 = vsub.s32 %v803, %v805
        %v807 = vrot.slane %v793, %v806
        %v808 = vcombine.low %v775, %v791
        %v809 = vcombine.high %v775, %v791
        %v811 = vunpack.c.l.s4 1934713408
        %v812 = vunpack.c.0.s8 %v811
        %v813 = vlaneseq
        %v814 = vshrl.u32 %v813, 7
        %v815 = vsub.s32 %v812, %v814
        %v816 = vrot.slane %v808, %v815
        %v818 = vunpack.c.l.s4 1934713408
        %v819 = vunpack.c.0.s8 %v818
        %v820 = vlaneseq
        %v821 = vshrl.u32 %v820, 7
        %v822 = vsub.s32 %v819, %v821
        %v823 = vrot.slane %v809, %v822
        %v824 = vcombine.high %v800, 0.0
        %v825 = vcombine.high %v807, 0.0
        %v826 = vcombine.high %v816, 0.0
        %v827 = vcombine.high %v823, 0.0
        %v828 = vcombine.low %v753, %v757
        %v829 = vcombine.high %v753, %v757
        %v831 = vunpack.c.l.s4 1983009808
        %v832 = vunpack.c.0.s8 %v831
        %v833 = vlaneseq
        %v834 = vshrl.u32 %v833, 7
        %v835 = vsub.s32 %v832, %v834
        %v836 = vrot.slane %v828, %v835
        %v838 = vunpack.c.l.s4 1983009808
        %v839 = vunpack.c.0.s8 %v838
        %v840 = vlaneseq
        %v841 = vshrl.u32 %v840, 7
        %v842 = vsub.s32 %v839, %v841
        %v843 = vrot.slane %v829, %v842
        %v844 = vcombine.low %v755, %v759
        %v845 = vcombine.high %v755, %v759
        %v847 = vunpack.c.l.s4 1983009808
        %v848 = vunpack.c.0.s8 %v847
        %v849 = vlaneseq
        %v850 = vshrl.u32 %v849, 7
        %v851 = vsub.s32 %v848, %v850
        %v852 = vrot.slane %v844, %v851
        %v854 = vunpack.c.l.s4 1983009808
        %v855 = vunpack.c.0.s8 %v854
        %v856 = vlaneseq
        %v857 = vshrl.u32 %v856, 7
        %v858 = vsub.s32 %v855, %v857
        %v859 = vrot.slane %v845, %v858
        %v860 = vcombine.low %v836, %v852
        %v861 = vcombine.high %v836, %v852
        %v863 = vunpack.c.l.s4 1934713408
        %v864 = vunpack.c.0.s8 %v863
        %v865 = vlaneseq
        %v866 = vshrl.u32 %v865, 7
        %v867 = vsub.s32 %v864, %v866
        %v868 = vrot.slane %v860, %v867
        %v870 = vunpack.c.l.s4 1934713408
        %v871 = vunpack.c.0.s8 %v870
        %v872 = vlaneseq
        %v873 = vshrl.u32 %v872, 7
        %v874 = vsub.s32 %v871, %v873
        %v875 = vrot.slane %v861, %v874
        %v876 = vcombine.low %v843, %v859
        %v877 = vcombine.high %v843, %v859
        %v879 = vunpack.c.l.s4 1934713408
        %v880 = vunpack.c.0.s8 %v879
        %v881 = vlaneseq
        %v882 = vshrl.u32 %v881, 7
        %v883 = vsub.s32 %v880, %v882
        %v884 = vrot.slane %v876, %v883
        %v886 = vunpack.c.l.s4 1934713408
        %v887 = vunpack.c.0.s8 %v886
        %v888 = vlaneseq
        %v889 = vshrl.u32 %v888, 7
        %v890 = vsub.s32 %v887, %v889
        %v891 = vrot.slane %v877, %v890
        %v892 = vcombine.high %v868, 0.0
        %v893 = vcombine.high %v875, 0.0
        %v894 = vcombine.high %v884, 0.0
        %v895 = vcombine.high %v891, 0.0
        %897 = vrot.lane.b32.xlu0 %v824, 16
        %v898 = vpop.permute.xlu0 %897
        %901 = vrot.lane.b32.xlu0 %v807, 32
        %v902 = vpop.permute.xlu0 %901
        %905 = vrot.lane.b32.xlu0 %v825, 48
        %v906 = vpop.permute.xlu0 %905
        %909 = vrot.lane.b32.xlu0 %v816, 64
        %v910 = vpop.permute.xlu0 %909
        %913 = vrot.lane.b32.xlu0 %v826, 80
        %v914 = vpop.permute.xlu0 %913
        %917 = vrot.lane.b32.xlu0 %v823, 96
        %v918 = vpop.permute.xlu0 %917
        %921 = vrot.lane.b32.xlu0 %v827, 112
        %v922 = vpop.permute.xlu0 %921
        %925 = vrot.lane.b32.xlu0 %v892, 16
        %v926 = vpop.permute.xlu0 %925
        %929 = vrot.lane.b32.xlu0 %v875, 32
        %v930 = vpop.permute.xlu0 %929
        %933 = vrot.lane.b32.xlu0 %v893, 48
        %v934 = vpop.permute.xlu0 %933
        %937 = vrot.lane.b32.xlu0 %v884, 64
        %v938 = vpop.permute.xlu0 %937
        %941 = vrot.lane.b32.xlu0 %v894, 80
        %v942 = vpop.permute.xlu0 %941
        %945 = vrot.lane.b32.xlu0 %v891, 96
        %v946 = vpop.permute.xlu0 %945
        %949 = vrot.lane.b32.xlu0 %v895, 112
        %v950 = vpop.permute.xlu0 %949
        %v952 = vsel %vm306, %v800, %v898
        %vm953 = vcmask 261120
        %v954 = vsel %vm953, %v952, %v902
        %vm955 = vcmask 392192
        %v956 = vsel %vm955, %v954, %v906
        %vm957 = vcmask 523264
        %v958 = vsel %vm957, %v956, %v910
        %vm959 = vcmask 654336
        %v960 = vsel %vm959, %v958, %v914
        %vm961 = vcmask 785408
        %v962 = vsel %vm961, %v960, %v918
        %vm963 = vcmask 916480
        %v964 = vsel %vm963, %v962, %v922
        %v965 = vsel %vm306, %v868, %v926
        %v966 = vsel %vm953, %v965, %v930
        %v967 = vsel %vm955, %v966, %v934
        %v968 = vsel %vm957, %v967, %v938
        %v969 = vsel %vm959, %v968, %v942
        %v970 = vsel %vm961, %v969, %v946
        %v971 = vsel %vm963, %v970, %v950
        %v972 = vpack.c.bf16 %v964, %v964
        %v973 = vpack.c.bf16 %v971, %v971
        %v974 = vld [vmem:[%s5] sm:$0x3]
        %v975 = vld [vmem:[%s6] sm:$0xf]
        %977 = vset.pattern.permute.xlu0 0
        %978 = vperm.xlu0 %977, %v975
        %v979 = vpop.permute.xlu0 %978
        %vm981 = vcmask 31744
        %v983 = vsel %vm981, %v974, 0
        %vm985 = vcmask 1041408
        %v987 = vsel %vm985, %v972, 0
        %v990 = vsel %vm985, %v973, 0
        %992 = vmatprep.subr.bf16.mxu0 %v990
        %993 = vmatpush1.bf16.msra.mxu0 %v987
        %994 = vmatprep.subr.bf16.mxu0 0
        %995 = vmatpush1.bf16.msra.mxu0 0
        %996 = vmatprep.subr.bf16.mxu0 0
        %997 = vmatpush1.bf16.msra.mxu0 0
        %998 = vmatprep.subr.bf16.mxu0 0
        %999 = vmatpush1.bf16.msra.mxu0 0
        %1000 = vmatprep.subr.bf16.mxu0 0
        %1001 = vmatpush1.bf16.msra.mxu0 0
        %1002 = vmatprep.subr.bf16.mxu0 0
        %1003 = vmatpush1.bf16.msra.mxu0 0
        %1004 = vmatprep.subr.bf16.mxu0 0
        %1005 = vmatpush1.bf16.msra.mxu0 0
        %1006 = vmatprep.subr.bf16.mxu0 0
        %1007 = vmatpush1.bf16.msra.mxu0 0
        %1008 = vmatprep.subr.bf16.mxu0 0
        %1009 = vmatpush1.bf16.msra.mxu0 0
        %1010 = vmatprep.subr.bf16.mxu0 0
        %1011 = vmatpush1.bf16.msra.mxu0 0
        %1012 = vmatprep.subr.bf16.mxu0 0
        %1013 = vmatpush1.bf16.msra.mxu0 0
        %1014 = vmatprep.subr.bf16.mxu0 0
        %1015 = vmatpush1.bf16.msra.mxu0 0
        %1016 = vmatprep.subr.bf16.mxu0 0
        %1017 = vmatpush1.bf16.msra.mxu0 0
        %1018 = vmatprep.subr.bf16.mxu0 0
        %1019 = vmatpush1.bf16.msra.mxu0 0
        %1020 = vmatprep.subr.bf16.mxu0 0
        %1021 = vmatpush1.bf16.msra.mxu0 0
        %1022 = vmatprep.subr.bf16.mxu0 0
        %1023 = vmatpush1.bf16.msra.mxu0 0
        %1024 = vmatprep.mubr.bf16.mxu0 0
        %1025 = vmatmul.mubr.bf16.gmra.mrb[0].mxu0 %v983
        %v1026 = vpop.f32.mrb[0].mxu0
        %v1027 = vadd.f32 %v979, %v1026
        %v1028 = vpop.f32.mrb[0].mxu0
        %v1029 = vadd.f32 %v979, %v1028
        %v1030 = vpop.f32.mrb[0].mxu0
        %v1031 = vpop.f32.mrb[0].mxu0
        %1032 = vdwg.mxu0
        %v1033 = vxor.u32 %v1027, 2147483648
        %v1034 = vxor.u32 %v1029, 2147483648
        %v1035 = vmul.f32 %v1033, 1.442695
        %v1036 = vpow.pop %v1035
        %v1037 = vmul.f32 %v1034, 1.442695
        %v1038 = vpow.pop %v1037
        %v1039 = vadd.f32 %v1036, 1.0
        %v1040 = vadd.f32 %v1038, 1.0
        %v1041 = vrcp.pop %v1039
        %v1042 = vmul.f32 1.0, %v1041
        %v1043 = vrcp.pop %v1040
        %v1044 = vmul.f32 1.0, %v1043
        %v1045 = vcombine.low %v298, %v302
        %v1046 = vcombine.high %v298, %v302
        %v1048 = vunpack.c.l.s4 1983009808
        %v1049 = vunpack.c.0.s8 %v1048
        %v1050 = vlaneseq
        %v1051 = vshrl.u32 %v1050, 7
        %v1052 = vsub.s32 %v1049, %v1051
        %v1053 = vrot.slane %v1045, %v1052
        %v1055 = vunpack.c.l.s4 1983009808
        %v1056 = vunpack.c.0.s8 %v1055
        %v1057 = vlaneseq
        %v1058 = vshrl.u32 %v1057, 7
        %v1059 = vsub.s32 %v1056, %v1058
        %v1060 = vrot.slane %v1046, %v1059
        %v1061 = vcombine.low %v300, %v304
        %v1062 = vcombine.high %v300, %v304
        %v1064 = vunpack.c.l.s4 1983009808
        %v1065 = vunpack.c.0.s8 %v1064
        %v1066 = vlaneseq
        %v1067 = vshrl.u32 %v1066, 7
        %v1068 = vsub.s32 %v1065, %v1067
        %v1069 = vrot.slane %v1061, %v1068
        %v1071 = vunpack.c.l.s4 1983009808
        %v1072 = vunpack.c.0.s8 %v1071
        %v1073 = vlaneseq
        %v1074 = vshrl.u32 %v1073, 7
        %v1075 = vsub.s32 %v1072, %v1074
        %v1076 = vrot.slane %v1062, %v1075
        %v1077 = vcombine.low %v1053, %v1069
        %v1078 = vcombine.high %v1053, %v1069
        %v1080 = vunpack.c.l.s4 1934713408
        %v1081 = vunpack.c.0.s8 %v1080
        %v1082 = vlaneseq
        %v1083 = vshrl.u32 %v1082, 7
        %v1084 = vsub.s32 %v1081, %v1083
        %v1085 = vrot.slane %v1077, %v1084
        %v1087 = vunpack.c.l.s4 1934713408
        %v1088 = vunpack.c.0.s8 %v1087
        %v1089 = vlaneseq
        %v1090 = vshrl.u32 %v1089, 7
        %v1091 = vsub.s32 %v1088, %v1090
        %v1092 = vrot.slane %v1078, %v1091
        %v1093 = vcombine.low %v1060, %v1076
        %v1094 = vcombine.high %v1060, %v1076
        %v1096 = vunpack.c.l.s4 1934713408
        %v1097 = vunpack.c.0.s8 %v1096
        %v1098 = vlaneseq
        %v1099 = vshrl.u32 %v1098, 7
        %v1100 = vsub.s32 %v1097, %v1099
        %v1101 = vrot.slane %v1093, %v1100
        %v1103 = vunpack.c.l.s4 1934713408
        %v1104 = vunpack.c.0.s8 %v1103
        %v1105 = vlaneseq
        %v1106 = vshrl.u32 %v1105, 7
        %v1107 = vsub.s32 %v1104, %v1106
        %v1108 = vrot.slane %v1094, %v1107
        %v1109 = vcombine.high %v1085, 0.0
        %v1110 = vcombine.high %v1092, 0.0
        %v1111 = vcombine.high %v1101, 0.0
        %v1112 = vcombine.high %v1108, 0.0
        %v1113 = vcombine.low %v299, %v303
        %v1114 = vcombine.high %v299, %v303
        %v1116 = vunpack.c.l.s4 1983009808
        %v1117 = vunpack.c.0.s8 %v1116
        %v1118 = vlaneseq
        %v1119 = vshrl.u32 %v1118, 7
        %v1120 = vsub.s32 %v1117, %v1119
        %v1121 = vrot.slane %v1113, %v1120
        %v1123 = vunpack.c.l.s4 1983009808
        %v1124 = vunpack.c.0.s8 %v1123
        %v1125 = vlaneseq
        %v1126 = vshrl.u32 %v1125, 7
        %v1127 = vsub.s32 %v1124, %v1126
        %v1128 = vrot.slane %v1114, %v1127
        %v1129 = vcombine.low %v301, %v305
        %v1130 = vcombine.high %v301, %v305
        %v1132 = vunpack.c.l.s4 1983009808
        %v1133 = vunpack.c.0.s8 %v1132
        %v1134 = vlaneseq
        %v1135 = vshrl.u32 %v1134, 7
        %v1136 = vsub.s32 %v1133, %v1135
        %v1137 = vrot.slane %v1129, %v1136
        %v1139 = vunpack.c.l.s4 1983009808
        %v1140 = vunpack.c.0.s8 %v1139
        %v1141 = vlaneseq
        %v1142 = vshrl.u32 %v1141, 7
        %v1143 = vsub.s32 %v1140, %v1142
        %v1144 = vrot.slane %v1130, %v1143
        %v1145 = vcombine.low %v1121, %v1137
        %v1146 = vcombine.high %v1121, %v1137
        %v1148 = vunpack.c.l.s4 1934713408
        %v1149 = vunpack.c.0.s8 %v1148
        %v1150 = vlaneseq
        %v1151 = vshrl.u32 %v1150, 7
        %v1152 = vsub.s32 %v1149, %v1151
        %v1153 = vrot.slane %v1145, %v1152
        %v1155 = vunpack.c.l.s4 1934713408
        %v1156 = vunpack.c.0.s8 %v1155
        %v1157 = vlaneseq
        %v1158 = vshrl.u32 %v1157, 7
        %v1159 = vsub.s32 %v1156, %v1158
        %v1160 = vrot.slane %v1146, %v1159
        %v1161 = vcombine.low %v1128, %v1144
        %v1162 = vcombine.high %v1128, %v1144
        %v1164 = vunpack.c.l.s4 1934713408
        %v1165 = vunpack.c.0.s8 %v1164
        %v1166 = vlaneseq
        %v1167 = vshrl.u32 %v1166, 7
        %v1168 = vsub.s32 %v1165, %v1167
        %v1169 = vrot.slane %v1161, %v1168
        %v1171 = vunpack.c.l.s4 1934713408
        %v1172 = vunpack.c.0.s8 %v1171
        %v1173 = vlaneseq
        %v1174 = vshrl.u32 %v1173, 7
        %v1175 = vsub.s32 %v1172, %v1174
        %v1176 = vrot.slane %v1162, %v1175
        %v1177 = vcombine.high %v1153, 0.0
        %v1178 = vcombine.high %v1160, 0.0
        %v1179 = vcombine.high %v1169, 0.0
        %v1180 = vcombine.high %v1176, 0.0
        %1182 = vrot.lane.b32.xlu0 %v1109, 16
        %v1183 = vpop.permute.xlu0 %1182
        %1186 = vrot.lane.b32.xlu0 %v1092, 32
        %v1187 = vpop.permute.xlu0 %1186
        %1190 = vrot.lane.b32.xlu0 %v1110, 48
        %v1191 = vpop.permute.xlu0 %1190
        %1194 = vrot.lane.b32.xlu0 %v1101, 64
        %v1195 = vpop.permute.xlu0 %1194
        %1198 = vrot.lane.b32.xlu0 %v1111, 80
        %v1199 = vpop.permute.xlu0 %1198
        %1202 = vrot.lane.b32.xlu0 %v1108, 96
        %v1203 = vpop.permute.xlu0 %1202
        %1206 = vrot.lane.b32.xlu0 %v1112, 112
        %v1207 = vpop.permute.xlu0 %1206
        %1210 = vrot.lane.b32.xlu0 %v1177, 16
        %v1211 = vpop.permute.xlu0 %1210
        %1214 = vrot.lane.b32.xlu0 %v1160, 32
        %v1215 = vpop.permute.xlu0 %1214
        %1218 = vrot.lane.b32.xlu0 %v1178, 48
        %v1219 = vpop.permute.xlu0 %1218
        %1222 = vrot.lane.b32.xlu0 %v1169, 64
        %v1223 = vpop.permute.xlu0 %1222
        %1226 = vrot.lane.b32.xlu0 %v1179, 80
        %v1227 = vpop.permute.xlu0 %1226
        %1230 = vrot.lane.b32.xlu0 %v1176, 96
        %v1231 = vpop.permute.xlu0 %1230
        %1234 = vrot.lane.b32.xlu0 %v1180, 112
        %v1235 = vpop.permute.xlu0 %1234
        %v1237 = vsel %vm306, %v1085, %v1183
        %v1238 = vsel %vm953, %v1237, %v1187
        %v1239 = vsel %vm955, %v1238, %v1191
        %v1240 = vsel %vm957, %v1239, %v1195
        %v1241 = vsel %vm959, %v1240, %v1199
        %v1242 = vsel %vm961, %v1241, %v1203
        %v1243 = vsel %vm963, %v1242, %v1207
        %v1244 = vsel %vm306, %v1153, %v1211
        %v1245 = vsel %vm953, %v1244, %v1215
        %v1246 = vsel %vm955, %v1245, %v1219
        %v1247 = vsel %vm957, %v1246, %v1223
        %v1248 = vsel %vm959, %v1247, %v1227
        %v1249 = vsel %vm961, %v1248, %v1231
        %v1250 = vsel %vm963, %v1249, %v1235
        %v1251 = vmul.f32 %v1243, %v1042
        %v1252 = vmul.f32 %v1250, %v1044
        %v1255 = vcombine.low %v1251, %v1252
        %1257 = vst [vmem:[%s296] sm:$0xff] %v1255
        %s1258 = sand.u32 %s184, 1
        %s1259 = scalar_lea.sflag [#allocation4], %s1258
        %s1260 = sand.u32 %s184, 1
        %s1261 = smul.addr %s1260, 8
        %s1262 = scalar_lea.vmem [#allocation5], %s1261
        // Predicated region
        $region53: #{tpu_custom_call.1} parent=47 // pred_check
          %p1263 = pneg %p194
        $region54: #{tpu_custom_call.1} parent=47 // pred_check_branch
          %1265 = sbr.rel (%p1263) target = $region56
        $region55: #{tpu_custom_call.1} parent=47 // pred_region
          %s1267 = ssub.s32 128, 128
          %1268 = vsyncadd %s1259, %s1267
          %s1269 = smul.addr %s24, 2
          %s1270 = smul.addr %s1269, 64
          %s1271 = scalar_lea.hbm %s7, %s1270
          %s1273 = sshll.u32 %s1262, 4
          %s1274 = int_to_ptr.vmem [resolvable:$true] %s1273
          %1276 = dma.vmem_to_hbm [thread:$0]  %s1274, 128, %s1271, %s1259
        $region56: #{tpu_custom_call.1} parent=47 // pred_fallthru
          _
      $region48: #{tpu_custom_call.1} parent=5 // pred_fallthru
        _
      %p1277 = scmp.le.s32.totalorder 2, %s19
      // Predicated region
      $region57: #{tpu_custom_call.1} parent=5 // pred_check
        %p1278 = pneg %p1277
      $region58: #{tpu_custom_call.1} parent=5 // pred_check_branch
        %1280 = sbr.rel (%p1278) target = $region60
      $region59: #{tpu_custom_call.1} parent=5 // pred_region
        %s1281 = ssub.s32 %s19, 2
        // Predicated region
        $region61: #{tpu_custom_call.1} parent=59 // pred_check
          %p1282 = pneg %p200
        $region62: #{tpu_custom_call.1} parent=59 // pred_check_branch
          %1284 = sbr.rel (%p1282) target = $region64
        $region63: #{tpu_custom_call.1} parent=59 // pred_region
          %s1285 = sand.u32 %s185, 1
          %s1286 = scalar_lea.sflag [#allocation4], %s1285
          %s1287 = sand.u32 %s185, 1
          %s1288 = smul.addr %s1287, 8
          %s1289 = scalar_lea.vmem [#allocation5], %s1288
          %1290 = dma.done %s1286, 128
        $region64: #{tpu_custom_call.1} parent=59 // pred_fallthru
          _
      $region60: #{tpu_custom_call.1} parent=5 // pred_fallthru
        _
    $region6: #{tpu_custom_call.1} parent=1 // loop_footer
      %s23 = sadd.s32 1, %s19
    $region7: #{tpu_custom_call.1} parent=1 // loop_footer_branch
      %18 = sbr.rel target = $region3
    $region8: #{tpu_custom_call.1} parent=1 // loop_exit
      _
    %1291 = vsyncpa [#allocation3], 1
    %s1292 = scalar_lea.sflag [#allocation3], 1
    %1293 = vsyncpa %s1292, 1
    %1294 = vsyncpa [#allocation4], 1
    %s1295 = scalar_lea.sflag [#allocation4], 1
    %1296 = vsyncpa %s1295, 1

</llo_original>
